<compile_context>
chip_gen: v7x
topology: tpu7x:2x2x1
jax: 0.10.0
libtpu: 0.0.40
codegen_flags: <defaults>
</compile_context>

<pallas_src>
import math

import jax
import jax.numpy as jnp
from jax.experimental import pallas as pl
from jax.experimental.pallas import tpu as pltpu

# ----- small synthetic config (consistent with the module) -----
IMG = 32          # vit_img_size
PATCH = 8         # vit_patch_size
C = 64            # vit_hidden_dim
I = 128           # vit_inter_dim
NH = 2            # vit_n_heads
NBLK = 2          # vit_n_blocks
EPS = 1e-6        # vit_ln_eps
CLS_FLAG = False  # vit_cls_flag
HD = C // NH
T = (IMG // PATCH) ** 2      # 16 patches
CP = 3 * PATCH * PATCH       # 192 = flattened patch length

# bf16 matmul operands + f32 accumulation (perf feedback).
# Set to jnp.float32 if bit-exact parity with the f32 PyTorch reference is required.
MATMUL_DTYPE = jnp.bfloat16


# ------------------------- in-kernel math helpers -------------------------
def _layernorm(x, w, b):
    mean = jnp.mean(x, axis=-1, keepdims=True)
    var = jnp.mean(jnp.square(x - mean), axis=-1, keepdims=True)
    return (x - mean) * jax.lax.rsqrt(var + EPS) * w + b


def _gelu_tanh(x):
    # matches nn.GELU(approximate='tanh')
    c = math.sqrt(2.0 / math.pi)
    return 0.5 * x * (1.0 + jnp.tanh(c * (x + 0.044715 * x * x * x)))


# ------------------------- fused ViT kernel -------------------------
def _vit_kernel(patches_ref, conv_w_ref, pos_ref,
                qkv_w_ref, qkv_b_ref, out_w_ref,
                fc1_w_ref, fc2_w_ref, small_ref, fc1_b_ref,
                lnf_ref, o_ref):
    """Fused forward for ONE image (grid axis = batch): patch-embed -> NBLK blocks -> LN."""
    scale = 1.0 / math.sqrt(HD)

    # ---- patch embedding: (T, CP) @ (CP, C); conv bias is folded into pos_ref ----
    x = jnp.dot(patches_ref[0], conv_w_ref[...],
                preferred_element_type=jnp.float32)
    x = x + pos_ref[...]                                  # (T, C), f32 residual stream
    # dropout(p=vit_dropout) is identity at inference

    # TODO(synk): at real ViT sizes (C=768, I=3072, NBLK=12) stream per-block weights
    # via a grid axis over NBLK (weights don't fit VMEM) instead of keeping them resident.
    for blk in range(NBLK):                               # static unroll, weights VMEM-resident
        sm = small_ref[blk]                               # (6, C): ln1w, ln1b, ln2w, ln2b, out_b, fc2_b
        ln1w, ln1b = sm[0:1], sm[1:2]
        ln2w, ln2b = sm[2:3], sm[3:4]
        out_b, fc2_b = sm[4:5], sm[5:6]

        # ---- attention branch: fused QKV, head-batched attention, single out-proj ----
        h = _layernorm(x, ln1w, ln1b)
        qkv = jnp.dot(h.astype(MATMUL_DTYPE), qkv_w_ref[blk],
                      preferred_element_type=jnp.float32) + qkv_b_ref[blk]   # (T, 3C)
        q = qkv[:, 0 * C:1 * C] * scale                   # fold 1/sqrt(HD) into q once
        k = qkv[:, 1 * C:2 * C]
        v = qkv[:, 2 * C:3 * C]
        qh = jnp.stack([q[:, hh * HD:(hh + 1) * HD] for hh in range(NH)]).astype(MATMUL_DTYPE)
        kh = jnp.stack([k[:, hh * HD:(hh + 1) * HD] for hh in range(NH)]).astype(MATMUL_DTYPE)
        vh = jnp.stack([v[:, hh * HD:(hh + 1) * HD] for hh in range(NH)]).astype(MATMUL_DTYPE)
        s = jnp.einsum('htd,hsd->hts', qh, kh,
                       preferred_element_type=jnp.float32)                   # (NH, T, T)
        s = s - jnp.max(s, axis=-1, keepdims=True)
        p = jnp.exp(s)
        p = p / jnp.sum(p, axis=-1, keepdims=True)         # exact softmax normalization
        ctx = jnp.einsum('hts,hsd->htd', p.astype(MATMUL_DTYPE), vh,
                         preferred_element_type=jnp.float32)                 # (NH, T, HD)
        ctx = jnp.concatenate([ctx[hh] for hh in range(NH)], axis=-1)        # (T, C)
        y = jnp.dot(ctx.astype(MATMUL_DTYPE), out_w_ref[blk],
                    preferred_element_type=jnp.float32) + out_b
        x = x + y                                          # residual

        # ---- MLP branch ----
        h2 = _layernorm(x, ln2w, ln2b)
        m = jnp.dot(h2.astype(MATMUL_DTYPE), fc1_w_ref[blk],
                    preferred_element_type=jnp.float32) + fc1_b_ref[blk]
        m = _gelu_tanh(m)
        m = jnp.dot(m.astype(MATMUL_DTYPE), fc2_w_ref[blk],
                    preferred_element_type=jnp.float32) + fc2_b
        x = x + m                                          # residual

    # ---- final LayerNorm fused into the epilogue ----
    lnf = lnf_ref[...]
    o_ref[0] = _layernorm(x, lnf[0:1], lnf[1:2])


# ------------------------- wrappers -------------------------
def extract_patches(x):
    # (B, 3, H, W) -> (B, T, 3*p*p) with per-patch ordering (c, kh, kw),
    # matching Conv2d(kernel=stride=p, padding='valid') as a linear map.
    b = x.shape[0]
    g = IMG // PATCH
    x = x.reshape(b, 3, g, PATCH, g, PATCH)
    x = x.transpose(0, 2, 4, 1, 3, 5)        # (B, gh, gw, 3, p, p)
    return x.reshape(b, T, CP)


def _bcast_spec(shape):
    nd = len(shape)
    return pl.BlockSpec(shape, lambda *_: (0,) * nd)


def _vmem_limit_bytes(args, out_bytes):
    arg_bytes = sum(int(a.size) * a.dtype.itemsize for a in args)
    # double-buffered operand windows + headroom for in-kernel intermediates
    return int(2 * (arg_bytes + out_bytes)) + (4 << 20)


def vit_forward(x, params):
    if CLS_FLAG:
        # TODO(synk): CLS path needs a prepended learned CLS token and a (T+1) position
        # embedding; only CLS_FLAG=False is implemented.
        raise NotImplementedError("cls_flag=True path not implemented")

    batch = x.shape[0]
    patches = extract_patches(x).astype(MATMUL_DTYPE)      # (B, T, CP)

    args = (patches, params["conv_w"], params["pos"],
            params["qkv_w"], params["qkv_b"], params["out_w"],
            params["fc1_w"], params["fc2_w"], params["small"],
            params["fc1_b"], params["lnf"])

    in_specs = [pl.BlockSpec((1, T, CP), lambda b: (b, 0, 0))] + \
               [_bcast_spec(a.shape) for a in args[1:]]
    out_specs = pl.BlockSpec((1, T, C), lambda b: (b, 0, 0))
    out_shape = jax.ShapeDtypeStruct((batch, T, C), jnp.float32)
    out_bytes = batch * T * C * 4

    # NOTE: efficiency scales with tokens-per-call; batch more images per call when possible.
    return pl.pallas_call(
        _vit_kernel,
        out_shape=out_shape,
        grid=(batch,),
        in_specs=in_specs,
        out_specs=out_specs,
        compiler_params=pltpu.CompilerParams(
            dimension_semantics=("parallel",),              # shards images across v7x's 2 TCs
            vmem_limit_bytes=_vmem_limit_bytes(args, out_bytes),
        ),
    )(*args)


# ------------------------- deterministic init -------------------------
def init_params(key):
    keys = jax.random.split(key, 2 + NBLK)
    # Conv2d(3, C, k=p, s=p): weight (C, 3, p, p) ~ N(0, 0.02), bias zeros
    conv_w = jax.random.normal(keys[0], (C, 3, PATCH, PATCH), jnp.float32) * 0.02
    conv_w = conv_w.reshape(C, CP).T                       # (CP, C)
    conv_b = jnp.zeros((C,), jnp.float32)
    # position_embedding = torch.rand(1, T, C) -> uniform [0, 1)
    pos = jax.random.uniform(keys[1], (T, C), jnp.float32)

    qkv_w, out_w, fc1_w, fc2_w = [], [], [], []
    for i in range(NBLK):
        ks = jax.random.split(keys[2 + i], 4)
        # nn.Linear weights ~ N(0, 0.02); stored transposed to (in, out)
        qkv_w.append((jax.random.normal(ks[0], (3 * C, C), jnp.float32) * 0.02).T)  # (C, 3C)
        out_w.append((jax.random.normal(ks[1], (C, C), jnp.float32) * 0.02).T)      # (C, C)
        fc1_w.append((jax.random.normal(ks[2], (I, C), jnp.float32) * 0.02).T)      # (C, I)
        fc2_w.append((jax.random.normal(ks[3], (C, I), jnp.float32) * 0.02).T)      # (I, C)

    onesC = jnp.ones((C,), jnp.float32)
    zerosC = jnp.zeros((C,), jnp.float32)
    # per-block small params: ln1w, ln1b, ln2w, ln2b, out_b, fc2_b  -> (NBLK, 6, C)
    small_row = jnp.stack([onesC, zerosC, onesC, zerosC, zerosC, zerosC])

    return {
        "conv_w": conv_w.astype(MATMUL_DTYPE),
        "pos": pos + conv_b[None, :],                      # conv bias folded in (f32)
        "qkv_w": jnp.stack(qkv_w).astype(MATMUL_DTYPE),    # (NBLK, C, 3C)
        "qkv_b": jnp.zeros((NBLK, 1, 3 * C), jnp.float32),
        "out_w": jnp.stack(out_w).astype(MATMUL_DTYPE),    # (NBLK, C, C)
        "fc1_w": jnp.stack(fc1_w).astype(MATMUL_DTYPE),    # (NBLK, C, I)
        "fc2_w": jnp.stack(fc2_w).astype(MATMUL_DTYPE),    # (NBLK, I, C)
        "small": jnp.tile(small_row[None], (NBLK, 1, 1)),  # (NBLK, 6, C) f32
        "fc1_b": jnp.zeros((NBLK, 1, I), jnp.float32),
        "lnf": jnp.stack([onesC, zerosC]),                 # (2, C): final LN w, b
    }


if __name__ == "__main__":
    key = jax.random.PRNGKey(0)
    k_param, k_input = jax.random.split(key)
    params = init_params(k_param)
    x = jax.random.normal(k_input, (2, 3, IMG, IMG), jnp.float32)  # NCHW
    out = vit_forward(x, params)
    out = jax.block_until_ready(out)
    assert out.shape == (2, T, C), out.shape
    print("KERNEL_OK")
</pallas_src>

<mosaic_0001>
module attributes {stable_mosaic.version = 11 : i64} {
  func.func @_vit_kernel(%arg0: i32, %arg1: memref<1x16x192xbf16, #tpu.memory_space<vmem>>, %arg2: memref<192x64xbf16, #tpu.memory_space<vmem>>, %arg3: memref<16x64xf32, #tpu.memory_space<vmem>>, %arg4: memref<2x64x192xbf16, #tpu.memory_space<vmem>>, %arg5: memref<2x1x192xf32, #tpu.memory_space<vmem>>, %arg6: memref<2x64x64xbf16, #tpu.memory_space<vmem>>, %arg7: memref<2x64x128xbf16, #tpu.memory_space<vmem>>, %arg8: memref<2x128x64xbf16, #tpu.memory_space<vmem>>, %arg9: memref<2x6x64xf32, #tpu.memory_space<vmem>>, %arg10: memref<2x1x128xf32, #tpu.memory_space<vmem>>, %arg11: memref<2x64xf32, #tpu.memory_space<vmem>>, %arg12: memref<1x16x64xf32, #tpu.memory_space<vmem>>) attributes {dimension_semantics = [#tpu.dimension_semantics<parallel>], iteration_bounds = array<i64: 2>, scalar_prefetch = 0 : i64, scratch_operands = 0 : i64, tpu.core_type = #tpu.core_type<tc>, window_params = [{transform_indices = @transform_0, window_bounds = array<i64: 1, 16, 192>}, {pipeline_mode = #tpu.pipeline_mode<synchronous>, transform_indices = @transform_1, window_bounds = array<i64: 192, 64>}, {pipeline_mode = #tpu.pipeline_mode<synchronous>, transform_indices = @transform_2, window_bounds = array<i64: 16, 64>}, {pipeline_mode = #tpu.pipeline_mode<synchronous>, transform_indices = @transform_3, window_bounds = array<i64: 2, 64, 192>}, {pipeline_mode = #tpu.pipeline_mode<synchronous>, transform_indices = @transform_4, window_bounds = array<i64: 2, 1, 192>}, {pipeline_mode = #tpu.pipeline_mode<synchronous>, transform_indices = @transform_5, window_bounds = array<i64: 2, 64, 64>}, {pipeline_mode = #tpu.pipeline_mode<synchronous>, transform_indices = @transform_6, window_bounds = array<i64: 2, 64, 128>}, {pipeline_mode = #tpu.pipeline_mode<synchronous>, transform_indices = @transform_7, window_bounds = array<i64: 2, 128, 64>}, {pipeline_mode = #tpu.pipeline_mode<synchronous>, transform_indices = @transform_8, window_bounds = array<i64: 2, 6, 64>}, {pipeline_mode = #tpu.pipeline_mode<synchronous>, transform_indices = @transform_9, window_bounds = array<i64: 2, 1, 128>}, {pipeline_mode = #tpu.pipeline_mode<synchronous>, transform_indices = @transform_10, window_bounds = array<i64: 2, 64>}, {transform_indices = @transform_11, window_bounds = array<i64: 1, 16, 64>}]} {
    %c0 = arith.constant 0 : index
    %c0_0 = arith.constant 0 : index
    %c0_1 = arith.constant 0 : index
    %0 = vector.load %arg1[%c0, %c0_0, %c0_1] : memref<1x16x192xbf16, #tpu.memory_space<vmem>>, vector<1x16x192xbf16>
    %1 = vector.shape_cast %0 : vector<1x16x192xbf16> to vector<16x192xbf16>
    %c0_2 = arith.constant 0 : index
    %c0_3 = arith.constant 0 : index
    %2 = vector.load %arg2[%c0_2, %c0_3] : memref<192x64xbf16, #tpu.memory_space<vmem>>, vector<192x64xbf16>
    %cst = arith.constant dense<0.000000e+00> : vector<16x64xf32>
    %3 = tpu.matmul %1, %2, %cst {dimension_numbers = #tpu.dot_dimension_numbers<[1], [0], [0], [1], [0, 0, 1, 1], [], []>} : vector<16x192xbf16>, vector<192x64xbf16>, vector<16x64xf32> -> vector<16x64xf32>
    %c0_4 = arith.constant 0 : index
    %c0_5 = arith.constant 0 : index
    %4 = vector.load %arg3[%c0_4, %c0_5] : memref<16x64xf32, #tpu.memory_space<vmem>>, vector<16x64xf32>
    %5 = arith.addf %3, %4 : vector<16x64xf32>
    %c0_6 = arith.constant 0 : index
    %c0_7 = arith.constant 0 : index
    %c0_8 = arith.constant 0 : index
    %6 = vector.load %arg9[%c0_6, %c0_7, %c0_8] : memref<2x6x64xf32, #tpu.memory_space<vmem>>, vector<1x6x64xf32>
    %7 = vector.shape_cast %6 : vector<1x6x64xf32> to vector<6x64xf32>
    %8 = vector.extract_strided_slice %7 {offsets = [0, 0], sizes = [1, 64], strides = [1, 1]} : vector<6x64xf32> to vector<1x64xf32>
    %9 = vector.extract_strided_slice %7 {offsets = [1, 0], sizes = [1, 64], strides = [1, 1]} : vector<6x64xf32> to vector<1x64xf32>
    %10 = vector.extract_strided_slice %7 {offsets = [2, 0], sizes = [1, 64], strides = [1, 1]} : vector<6x64xf32> to vector<1x64xf32>
    %11 = vector.extract_strided_slice %7 {offsets = [3, 0], sizes = [1, 64], strides = [1, 1]} : vector<6x64xf32> to vector<1x64xf32>
    %12 = vector.extract_strided_slice %7 {offsets = [4, 0], sizes = [1, 64], strides = [1, 1]} : vector<6x64xf32> to vector<1x64xf32>
    %13 = vector.extract_strided_slice %7 {offsets = [5, 0], sizes = [1, 64], strides = [1, 1]} : vector<6x64xf32> to vector<1x64xf32>
    %cst_9 = arith.constant dense<0.000000e+00> : vector<16xf32>
    %14 = vector.multi_reduction <add>, %5, %cst_9 [1] : vector<16x64xf32> to vector<16xf32>
    %15 = vector.shape_cast %14 : vector<16xf32> to vector<16x1xf32>
    %cst_10 = arith.constant 6.400000e+01 : f32
    %16 = vector.broadcast %cst_10 : f32 to vector<16x1xf32>
    %17 = arith.divf %15, %16 : vector<16x1xf32>
    %18 = vector.broadcast %17 : vector<16x1xf32> to vector<16x64xf32>
    %19 = arith.subf %5, %18 : vector<16x64xf32>
    %20 = arith.mulf %19, %19 : vector<16x64xf32>
    %cst_11 = arith.constant dense<0.000000e+00> : vector<16xf32>
    %21 = vector.multi_reduction <add>, %20, %cst_11 [1] : vector<16x64xf32> to vector<16xf32>
    %22 = vector.shape_cast %21 : vector<16xf32> to vector<16x1xf32>
    %cst_12 = arith.constant 6.400000e+01 : f32
    %23 = vector.broadcast %cst_12 : f32 to vector<16x1xf32>
    %24 = arith.divf %22, %23 : vector<16x1xf32>
    %25 = vector.broadcast %17 : vector<16x1xf32> to vector<16x64xf32>
    %26 = arith.subf %5, %25 : vector<16x64xf32>
    %cst_13 = arith.constant 9.99999997E-7 : f32
    %27 = vector.broadcast %cst_13 : f32 to vector<16x1xf32>
    %28 = arith.addf %24, %27 : vector<16x1xf32>
    %29 = math.rsqrt %28 : vector<16x1xf32>
    %30 = vector.broadcast %29 : vector<16x1xf32> to vector<16x64xf32>
    %31 = arith.mulf %26, %30 : vector<16x64xf32>
    %32 = vector.broadcast %8 : vector<1x64xf32> to vector<16x64xf32>
    %33 = arith.mulf %31, %32 : vector<16x64xf32>
    %34 = vector.broadcast %9 : vector<1x64xf32> to vector<16x64xf32>
    %35 = arith.addf %33, %34 : vector<16x64xf32>
    %36 = arith.truncf %35 : vector<16x64xf32> to vector<16x64xbf16>
    %c0_14 = arith.constant 0 : index
    %c0_15 = arith.constant 0 : index
    %c0_16 = arith.constant 0 : index
    %37 = vector.load %arg4[%c0_14, %c0_15, %c0_16] : memref<2x64x192xbf16, #tpu.memory_space<vmem>>, vector<1x64x192xbf16>
    %38 = vector.shape_cast %37 : vector<1x64x192xbf16> to vector<64x192xbf16>
    %cst_17 = arith.constant dense<0.000000e+00> : vector<16x192xf32>
    %39 = tpu.matmul %36, %38, %cst_17 {dimension_numbers = #tpu.dot_dimension_numbers<[1], [0], [0], [1], [0, 0, 1, 1], [], []>} : vector<16x64xbf16>, vector<64x192xbf16>, vector<16x192xf32> -> vector<16x192xf32>
    %c0_18 = arith.constant 0 : index
    %c0_19 = arith.constant 0 : index
    %c0_20 = arith.constant 0 : index
    %40 = vector.load %arg5[%c0_18, %c0_19, %c0_20] : memref<2x1x192xf32, #tpu.memory_space<vmem>>, vector<1x1x192xf32>
    %41 = vector.shape_cast %40 : vector<1x1x192xf32> to vector<1x192xf32>
    %42 = vector.broadcast %41 : vector<1x192xf32> to vector<16x192xf32>
    %43 = arith.addf %39, %42 : vector<16x192xf32>
    %44 = vector.extract_strided_slice %43 {offsets = [0, 0], sizes = [16, 64], strides = [1, 1]} : vector<16x192xf32> to vector<16x64xf32>
    %cst_21 = arith.constant 0.176776692 : f32
    %45 = vector.broadcast %cst_21 : f32 to vector<16x64xf32>
    %46 = arith.mulf %44, %45 : vector<16x64xf32>
    %47 = vector.extract_strided_slice %43 {offsets = [0, 64], sizes = [16, 64], strides = [1, 1]} : vector<16x192xf32> to vector<16x64xf32>
    %48 = vector.extract_strided_slice %43 {offsets = [0, 128], sizes = [16, 64], strides = [1, 1]} : vector<16x192xf32> to vector<16x64xf32>
    %49 = vector.extract_strided_slice %46 {offsets = [0, 0], sizes = [16, 32], strides = [1, 1]} : vector<16x64xf32> to vector<16x32xf32>
    %50 = vector.extract_strided_slice %46 {offsets = [0, 32], sizes = [16, 32], strides = [1, 1]} : vector<16x64xf32> to vector<16x32xf32>
    %51 = vector.shape_cast %49 : vector<16x32xf32> to vector<1x16x32xf32>
    %52 = vector.shape_cast %50 : vector<16x32xf32> to vector<1x16x32xf32>
    %53 = tpu.concatenate %51, %52 in 0 : vector<1x16x32xf32>, vector<1x16x32xf32> -> vector<2x16x32xf32>
    %54 = arith.truncf %53 : vector<2x16x32xf32> to vector<2x16x32xbf16>
    %55 = vector.extract_strided_slice %47 {offsets = [0, 0], sizes = [16, 32], strides = [1, 1]} : vector<16x64xf32> to vector<16x32xf32>
    %56 = vector.extract_strided_slice %47 {offsets = [0, 32], sizes = [16, 32], strides = [1, 1]} : vector<16x64xf32> to vector<16x32xf32>
    %57 = vector.shape_cast %55 : vector<16x32xf32> to vector<1x16x32xf32>
    %58 = vector.shape_cast %56 : vector<16x32xf32> to vector<1x16x32xf32>
    %59 = tpu.concatenate %57, %58 in 0 : vector<1x16x32xf32>, vector<1x16x32xf32> -> vector<2x16x32xf32>
    %60 = arith.truncf %59 : vector<2x16x32xf32> to vector<2x16x32xbf16>
    %61 = vector.extract_strided_slice %48 {offsets = [0, 0], sizes = [16, 32], strides = [1, 1]} : vector<16x64xf32> to vector<16x32xf32>
    %62 = vector.extract_strided_slice %48 {offsets = [0, 32], sizes = [16, 32], strides = [1, 1]} : vector<16x64xf32> to vector<16x32xf32>
    %63 = vector.shape_cast %61 : vector<16x32xf32> to vector<1x16x32xf32>
    %64 = vector.shape_cast %62 : vector<16x32xf32> to vector<1x16x32xf32>
    %65 = tpu.concatenate %63, %64 in 0 : vector<1x16x32xf32>, vector<1x16x32xf32> -> vector<2x16x32xf32>
    %66 = arith.truncf %65 : vector<2x16x32xf32> to vector<2x16x32xbf16>
    "tpu.trace_start"() <{level = 10 : i32, message = "htd,hsd->hts"}> : () -> ()
    %cst_22 = arith.constant dense<0.000000e+00> : vector<2x16x16xf32>
    %67 = tpu.matmul %54, %60, %cst_22 {dimension_numbers = #tpu.dot_dimension_numbers<[2], [2], [1], [1], [0, 0, 0, 1, 1, 1], [0], [0]>} : vector<2x16x32xbf16>, vector<2x16x32xbf16>, vector<2x16x16xf32> -> vector<2x16x16xf32>
    "tpu.trace_stop"() : () -> ()
    %cst_23 = arith.constant dense<0xFF800000> : vector<2x16xf32>
    %68 = vector.multi_reduction <maximumf>, %67, %cst_23 [2] : vector<2x16x16xf32> to vector<2x16xf32>
    %69 = vector.shape_cast %68 : vector<2x16xf32> to vector<2x16x1xf32>
    %70 = vector.broadcast %69 : vector<2x16x1xf32> to vector<2x16x16xf32>
    %71 = arith.subf %67, %70 : vector<2x16x16xf32>
    %72 = math.exp %71 : vector<2x16x16xf32>
    %cst_24 = arith.constant dense<0.000000e+00> : vector<2x16xf32>
    %73 = vector.multi_reduction <add>, %72, %cst_24 [2] : vector<2x16x16xf32> to vector<2x16xf32>
    %74 = vector.shape_cast %73 : vector<2x16xf32> to vector<2x16x1xf32>
    %75 = vector.broadcast %74 : vector<2x16x1xf32> to vector<2x16x16xf32>
    %76 = arith.divf %72, %75 : vector<2x16x16xf32>
    %77 = arith.truncf %76 : vector<2x16x16xf32> to vector<2x16x16xbf16>
    "tpu.trace_start"() <{level = 10 : i32, message = "hts,hsd->htd"}> : () -> ()
    %cst_25 = arith.constant dense<0.000000e+00> : vector<2x16x32xf32>
    %78 = tpu.matmul %77, %66, %cst_25 {dimension_numbers = #tpu.dot_dimension_numbers<[2], [1], [1], [2], [0, 0, 0, 1, 1, 2], [0], [0]>} : vector<2x16x16xbf16>, vector<2x16x32xbf16>, vector<2x16x32xf32> -> vector<2x16x32xf32>
    "tpu.trace_stop"() : () -> ()
    %79 = vector.extract_strided_slice %78 {offsets = [0, 0, 0], sizes = [1, 16, 32], strides = [1, 1, 1]} : vector<2x16x32xf32> to vector<1x16x32xf32>
    %80 = vector.shape_cast %79 : vector<1x16x32xf32> to vector<16x32xf32>
    %81 = vector.extract_strided_slice %78 {offsets = [1, 0, 0], sizes = [1, 16, 32], strides = [1, 1, 1]} : vector<2x16x32xf32> to vector<1x16x32xf32>
    %82 = vector.shape_cast %81 : vector<1x16x32xf32> to vector<16x32xf32>
    %83 = tpu.concatenate %80, %82 in 1 : vector<16x32xf32>, vector<16x32xf32> -> vector<16x64xf32>
    %84 = arith.truncf %83 : vector<16x64xf32> to vector<16x64xbf16>
    %c0_26 = arith.constant 0 : index
    %c0_27 = arith.constant 0 : index
    %c0_28 = arith.constant 0 : index
    %85 = vector.load %arg6[%c0_26, %c0_27, %c0_28] : memref<2x64x64xbf16, #tpu.memory_space<vmem>>, vector<1x64x64xbf16>
    %86 = vector.shape_cast %85 : vector<1x64x64xbf16> to vector<64x64xbf16>
    %cst_29 = arith.constant dense<0.000000e+00> : vector<16x64xf32>
    %87 = tpu.matmul %84, %86, %cst_29 {dimension_numbers = #tpu.dot_dimension_numbers<[1], [0], [0], [1], [0, 0, 1, 1], [], []>} : vector<16x64xbf16>, vector<64x64xbf16>, vector<16x64xf32> -> vector<16x64xf32>
    %88 = vector.broadcast %12 : vector<1x64xf32> to vector<16x64xf32>
    %89 = arith.addf %87, %88 : vector<16x64xf32>
    %90 = arith.addf %5, %89 : vector<16x64xf32>
    %cst_30 = arith.constant dense<0.000000e+00> : vector<16xf32>
    %91 = vector.multi_reduction <add>, %90, %cst_30 [1] : vector<16x64xf32> to vector<16xf32>
    %92 = vector.shape_cast %91 : vector<16xf32> to vector<16x1xf32>
    %cst_31 = arith.constant 6.400000e+01 : f32
    %93 = vector.broadcast %cst_31 : f32 to vector<16x1xf32>
    %94 = arith.divf %92, %93 : vector<16x1xf32>
    %95 = vector.broadcast %94 : vector<16x1xf32> to vector<16x64xf32>
    %96 = arith.subf %90, %95 : vector<16x64xf32>
    %97 = arith.mulf %96, %96 : vector<16x64xf32>
    %cst_32 = arith.constant dense<0.000000e+00> : vector<16xf32>
    %98 = vector.multi_reduction <add>, %97, %cst_32 [1] : vector<16x64xf32> to vector<16xf32>
    %99 = vector.shape_cast %98 : vector<16xf32> to vector<16x1xf32>
    %cst_33 = arith.constant 6.400000e+01 : f32
    %100 = vector.broadcast %cst_33 : f32 to vector<16x1xf32>
    %101 = arith.divf %99, %100 : vector<16x1xf32>
    %102 = vector.broadcast %94 : vector<16x1xf32> to vector<16x64xf32>
    %103 = arith.subf %90, %102 : vector<16x64xf32>
    %cst_34 = arith.constant 9.99999997E-7 : f32
    %104 = vector.broadcast %cst_34 : f32 to vector<16x1xf32>
    %105 = arith.addf %101, %104 : vector<16x1xf32>
    %106 = math.rsqrt %105 : vector<16x1xf32>
    %107 = vector.broadcast %106 : vector<16x1xf32> to vector<16x64xf32>
    %108 = arith.mulf %103, %107 : vector<16x64xf32>
    %109 = vector.broadcast %10 : vector<1x64xf32> to vector<16x64xf32>
    %110 = arith.mulf %108, %109 : vector<16x64xf32>
    %111 = vector.broadcast %11 : vector<1x64xf32> to vector<16x64xf32>
    %112 = arith.addf %110, %111 : vector<16x64xf32>
    %113 = arith.truncf %112 : vector<16x64xf32> to vector<16x64xbf16>
    %c0_35 = arith.constant 0 : index
    %c0_36 = arith.constant 0 : index
    %c0_37 = arith.constant 0 : index
    %114 = vector.load %arg7[%c0_35, %c0_36, %c0_37] : memref<2x64x128xbf16, #tpu.memory_space<vmem>>, vector<1x64x128xbf16>
    %115 = vector.shape_cast %114 : vector<1x64x128xbf16> to vector<64x128xbf16>
    %cst_38 = arith.constant dense<0.000000e+00> : vector<16x128xf32>
    %116 = tpu.matmul %113, %115, %cst_38 {dimension_numbers = #tpu.dot_dimension_numbers<[1], [0], [0], [1], [0, 0, 1, 1], [], []>} : vector<16x64xbf16>, vector<64x128xbf16>, vector<16x128xf32> -> vector<16x128xf32>
    %c0_39 = arith.constant 0 : index
    %c0_40 = arith.constant 0 : index
    %c0_41 = arith.constant 0 : index
    %117 = vector.load %arg10[%c0_39, %c0_40, %c0_41] : memref<2x1x128xf32, #tpu.memory_space<vmem>>, vector<1x1x128xf32>
    %118 = vector.shape_cast %117 : vector<1x1x128xf32> to vector<1x128xf32>
    %119 = vector.broadcast %118 : vector<1x128xf32> to vector<16x128xf32>
    %120 = arith.addf %116, %119 : vector<16x128xf32>
    %cst_42 = arith.constant 5.000000e-01 : f32
    %121 = vector.broadcast %cst_42 : f32 to vector<16x128xf32>
    %122 = arith.mulf %121, %120 : vector<16x128xf32>
    %cst_43 = arith.constant 4.471500e-02 : f32
    %123 = vector.broadcast %cst_43 : f32 to vector<16x128xf32>
    %124 = arith.mulf %123, %120 : vector<16x128xf32>
    %125 = arith.mulf %124, %120 : vector<16x128xf32>
    %126 = arith.mulf %125, %120 : vector<16x128xf32>
    %127 = arith.addf %120, %126 : vector<16x128xf32>
    %cst_44 = arith.constant 0.797884583 : f32
    %128 = vector.broadcast %cst_44 : f32 to vector<16x128xf32>
    %129 = arith.mulf %128, %127 : vector<16x128xf32>
    %130 = math.tanh %129 : vector<16x128xf32>
    %cst_45 = arith.constant 1.000000e+00 : f32
    %131 = vector.broadcast %cst_45 : f32 to vector<16x128xf32>
    %132 = arith.addf %131, %130 : vector<16x128xf32>
    %133 = arith.mulf %122, %132 : vector<16x128xf32>
    %134 = arith.truncf %133 : vector<16x128xf32> to vector<16x128xbf16>
    %c0_46 = arith.constant 0 : index
    %c0_47 = arith.constant 0 : index
    %c0_48 = arith.constant 0 : index
    %135 = vector.load %arg8[%c0_46, %c0_47, %c0_48] : memref<2x128x64xbf16, #tpu.memory_space<vmem>>, vector<1x128x64xbf16>
    %136 = vector.shape_cast %135 : vector<1x128x64xbf16> to vector<128x64xbf16>
    %cst_49 = arith.constant dense<0.000000e+00> : vector<16x64xf32>
    %137 = tpu.matmul %134, %136, %cst_49 {dimension_numbers = #tpu.dot_dimension_numbers<[1], [0], [0], [1], [0, 0, 1, 1], [], []>} : vector<16x128xbf16>, vector<128x64xbf16>, vector<16x64xf32> -> vector<16x64xf32>
    %138 = vector.broadcast %13 : vector<1x64xf32> to vector<16x64xf32>
    %139 = arith.addf %137, %138 : vector<16x64xf32>
    %140 = arith.addf %90, %139 : vector<16x64xf32>
    %c1 = arith.constant 1 : index
    %c0_50 = arith.constant 0 : index
    %c0_51 = arith.constant 0 : index
    %141 = vector.load %arg9[%c1, %c0_50, %c0_51] : memref<2x6x64xf32, #tpu.memory_space<vmem>>, vector<1x6x64xf32>
    %142 = vector.shape_cast %141 : vector<1x6x64xf32> to vector<6x64xf32>
    %143 = vector.extract_strided_slice %142 {offsets = [0, 0], sizes = [1, 64], strides = [1, 1]} : vector<6x64xf32> to vector<1x64xf32>
    %144 = vector.extract_strided_slice %142 {offsets = [1, 0], sizes = [1, 64], strides = [1, 1]} : vector<6x64xf32> to vector<1x64xf32>
    %145 = vector.extract_strided_slice %142 {offsets = [2, 0], sizes = [1, 64], strides = [1, 1]} : vector<6x64xf32> to vector<1x64xf32>
    %146 = vector.extract_strided_slice %142 {offsets = [3, 0], sizes = [1, 64], strides = [1, 1]} : vector<6x64xf32> to vector<1x64xf32>
    %147 = vector.extract_strided_slice %142 {offsets = [4, 0], sizes = [1, 64], strides = [1, 1]} : vector<6x64xf32> to vector<1x64xf32>
    %148 = vector.extract_strided_slice %142 {offsets = [5, 0], sizes = [1, 64], strides = [1, 1]} : vector<6x64xf32> to vector<1x64xf32>
    %cst_52 = arith.constant dense<0.000000e+00> : vector<16xf32>
    %149 = vector.multi_reduction <add>, %140, %cst_52 [1] : vector<16x64xf32> to vector<16xf32>
    %150 = vector.shape_cast %149 : vector<16xf32> to vector<16x1xf32>
    %cst_53 = arith.constant 6.400000e+01 : f32
    %151 = vector.broadcast %cst_53 : f32 to vector<16x1xf32>
    %152 = arith.divf %150, %151 : vector<16x1xf32>
    %153 = vector.broadcast %152 : vector<16x1xf32> to vector<16x64xf32>
    %154 = arith.subf %140, %153 : vector<16x64xf32>
    %155 = arith.mulf %154, %154 : vector<16x64xf32>
    %cst_54 = arith.constant dense<0.000000e+00> : vector<16xf32>
    %156 = vector.multi_reduction <add>, %155, %cst_54 [1] : vector<16x64xf32> to vector<16xf32>
    %157 = vector.shape_cast %156 : vector<16xf32> to vector<16x1xf32>
    %cst_55 = arith.constant 6.400000e+01 : f32
    %158 = vector.broadcast %cst_55 : f32 to vector<16x1xf32>
    %159 = arith.divf %157, %158 : vector<16x1xf32>
    %160 = vector.broadcast %152 : vector<16x1xf32> to vector<16x64xf32>
    %161 = arith.subf %140, %160 : vector<16x64xf32>
    %cst_56 = arith.constant 9.99999997E-7 : f32
    %162 = vector.broadcast %cst_56 : f32 to vector<16x1xf32>
    %163 = arith.addf %159, %162 : vector<16x1xf32>
    %164 = math.rsqrt %163 : vector<16x1xf32>
    %165 = vector.broadcast %164 : vector<16x1xf32> to vector<16x64xf32>
    %166 = arith.mulf %161, %165 : vector<16x64xf32>
    %167 = vector.broadcast %143 : vector<1x64xf32> to vector<16x64xf32>
    %168 = arith.mulf %166, %167 : vector<16x64xf32>
    %169 = vector.broadcast %144 : vector<1x64xf32> to vector<16x64xf32>
    %170 = arith.addf %168, %169 : vector<16x64xf32>
    %171 = arith.truncf %170 : vector<16x64xf32> to vector<16x64xbf16>
    %c1_57 = arith.constant 1 : index
    %c0_58 = arith.constant 0 : index
    %c0_59 = arith.constant 0 : index
    %172 = vector.load %arg4[%c1_57, %c0_58, %c0_59] : memref<2x64x192xbf16, #tpu.memory_space<vmem>>, vector<1x64x192xbf16>
    %173 = vector.shape_cast %172 : vector<1x64x192xbf16> to vector<64x192xbf16>
    %cst_60 = arith.constant dense<0.000000e+00> : vector<16x192xf32>
    %174 = tpu.matmul %171, %173, %cst_60 {dimension_numbers = #tpu.dot_dimension_numbers<[1], [0], [0], [1], [0, 0, 1, 1], [], []>} : vector<16x64xbf16>, vector<64x192xbf16>, vector<16x192xf32> -> vector<16x192xf32>
    %c1_61 = arith.constant 1 : index
    %c0_62 = arith.constant 0 : index
    %c0_63 = arith.constant 0 : index
    %175 = vector.load %arg5[%c1_61, %c0_62, %c0_63] : memref<2x1x192xf32, #tpu.memory_space<vmem>>, vector<1x1x192xf32>
    %176 = vector.shape_cast %175 : vector<1x1x192xf32> to vector<1x192xf32>
    %177 = vector.broadcast %176 : vector<1x192xf32> to vector<16x192xf32>
    %178 = arith.addf %174, %177 : vector<16x192xf32>
    %179 = vector.extract_strided_slice %178 {offsets = [0, 0], sizes = [16, 64], strides = [1, 1]} : vector<16x192xf32> to vector<16x64xf32>
    %cst_64 = arith.constant 0.176776692 : f32
    %180 = vector.broadcast %cst_64 : f32 to vector<16x64xf32>
    %181 = arith.mulf %179, %180 : vector<16x64xf32>
    %182 = vector.extract_strided_slice %178 {offsets = [0, 64], sizes = [16, 64], strides = [1, 1]} : vector<16x192xf32> to vector<16x64xf32>
    %183 = vector.extract_strided_slice %178 {offsets = [0, 128], sizes = [16, 64], strides = [1, 1]} : vector<16x192xf32> to vector<16x64xf32>
    %184 = vector.extract_strided_slice %181 {offsets = [0, 0], sizes = [16, 32], strides = [1, 1]} : vector<16x64xf32> to vector<16x32xf32>
    %185 = vector.extract_strided_slice %181 {offsets = [0, 32], sizes = [16, 32], strides = [1, 1]} : vector<16x64xf32> to vector<16x32xf32>
    %186 = vector.shape_cast %184 : vector<16x32xf32> to vector<1x16x32xf32>
    %187 = vector.shape_cast %185 : vector<16x32xf32> to vector<1x16x32xf32>
    %188 = tpu.concatenate %186, %187 in 0 : vector<1x16x32xf32>, vector<1x16x32xf32> -> vector<2x16x32xf32>
    %189 = arith.truncf %188 : vector<2x16x32xf32> to vector<2x16x32xbf16>
    %190 = vector.extract_strided_slice %182 {offsets = [0, 0], sizes = [16, 32], strides = [1, 1]} : vector<16x64xf32> to vector<16x32xf32>
    %191 = vector.extract_strided_slice %182 {offsets = [0, 32], sizes = [16, 32], strides = [1, 1]} : vector<16x64xf32> to vector<16x32xf32>
    %192 = vector.shape_cast %190 : vector<16x32xf32> to vector<1x16x32xf32>
    %193 = vector.shape_cast %191 : vector<16x32xf32> to vector<1x16x32xf32>
    %194 = tpu.concatenate %192, %193 in 0 : vector<1x16x32xf32>, vector<1x16x32xf32> -> vector<2x16x32xf32>
    %195 = arith.truncf %194 : vector<2x16x32xf32> to vector<2x16x32xbf16>
    %196 = vector.extract_strided_slice %183 {offsets = [0, 0], sizes = [16, 32], strides = [1, 1]} : vector<16x64xf32> to vector<16x32xf32>
    %197 = vector.extract_strided_slice %183 {offsets = [0, 32], sizes = [16, 32], strides = [1, 1]} : vector<16x64xf32> to vector<16x32xf32>
    %198 = vector.shape_cast %196 : vector<16x32xf32> to vector<1x16x32xf32>
    %199 = vector.shape_cast %197 : vector<16x32xf32> to vector<1x16x32xf32>
    %200 = tpu.concatenate %198, %199 in 0 : vector<1x16x32xf32>, vector<1x16x32xf32> -> vector<2x16x32xf32>
    %201 = arith.truncf %200 : vector<2x16x32xf32> to vector<2x16x32xbf16>
    "tpu.trace_start"() <{level = 10 : i32, message = "htd,hsd->hts"}> : () -> ()
    %cst_65 = arith.constant dense<0.000000e+00> : vector<2x16x16xf32>
    %202 = tpu.matmul %189, %195, %cst_65 {dimension_numbers = #tpu.dot_dimension_numbers<[2], [2], [1], [1], [0, 0, 0, 1, 1, 1], [0], [0]>} : vector<2x16x32xbf16>, vector<2x16x32xbf16>, vector<2x16x16xf32> -> vector<2x16x16xf32>
    "tpu.trace_stop"() : () -> ()
    %cst_66 = arith.constant dense<0xFF800000> : vector<2x16xf32>
    %203 = vector.multi_reduction <maximumf>, %202, %cst_66 [2] : vector<2x16x16xf32> to vector<2x16xf32>
    %204 = vector.shape_cast %203 : vector<2x16xf32> to vector<2x16x1xf32>
    %205 = vector.broadcast %204 : vector<2x16x1xf32> to vector<2x16x16xf32>
    %206 = arith.subf %202, %205 : vector<2x16x16xf32>
    %207 = math.exp %206 : vector<2x16x16xf32>
    %cst_67 = arith.constant dense<0.000000e+00> : vector<2x16xf32>
    %208 = vector.multi_reduction <add>, %207, %cst_67 [2] : vector<2x16x16xf32> to vector<2x16xf32>
    %209 = vector.shape_cast %208 : vector<2x16xf32> to vector<2x16x1xf32>
    %210 = vector.broadcast %209 : vector<2x16x1xf32> to vector<2x16x16xf32>
    %211 = arith.divf %207, %210 : vector<2x16x16xf32>
    %212 = arith.truncf %211 : vector<2x16x16xf32> to vector<2x16x16xbf16>
    "tpu.trace_start"() <{level = 10 : i32, message = "hts,hsd->htd"}> : () -> ()
    %cst_68 = arith.constant dense<0.000000e+00> : vector<2x16x32xf32>
    %213 = tpu.matmul %212, %201, %cst_68 {dimension_numbers = #tpu.dot_dimension_numbers<[2], [1], [1], [2], [0, 0, 0, 1, 1, 2], [0], [0]>} : vector<2x16x16xbf16>, vector<2x16x32xbf16>, vector<2x16x32xf32> -> vector<2x16x32xf32>
    "tpu.trace_stop"() : () -> ()
    %214 = vector.extract_strided_slice %213 {offsets = [0, 0, 0], sizes = [1, 16, 32], strides = [1, 1, 1]} : vector<2x16x32xf32> to vector<1x16x32xf32>
    %215 = vector.shape_cast %214 : vector<1x16x32xf32> to vector<16x32xf32>
    %216 = vector.extract_strided_slice %213 {offsets = [1, 0, 0], sizes = [1, 16, 32], strides = [1, 1, 1]} : vector<2x16x32xf32> to vector<1x16x32xf32>
    %217 = vector.shape_cast %216 : vector<1x16x32xf32> to vector<16x32xf32>
    %218 = tpu.concatenate %215, %217 in 1 : vector<16x32xf32>, vector<16x32xf32> -> vector<16x64xf32>
    %219 = arith.truncf %218 : vector<16x64xf32> to vector<16x64xbf16>
    %c1_69 = arith.constant 1 : index
    %c0_70 = arith.constant 0 : index
    %c0_71 = arith.constant 0 : index
    %220 = vector.load %arg6[%c1_69, %c0_70, %c0_71] : memref<2x64x64xbf16, #tpu.memory_space<vmem>>, vector<1x64x64xbf16>
    %221 = vector.shape_cast %220 : vector<1x64x64xbf16> to vector<64x64xbf16>
    %cst_72 = arith.constant dense<0.000000e+00> : vector<16x64xf32>
    %222 = tpu.matmul %219, %221, %cst_72 {dimension_numbers = #tpu.dot_dimension_numbers<[1], [0], [0], [1], [0, 0, 1, 1], [], []>} : vector<16x64xbf16>, vector<64x64xbf16>, vector<16x64xf32> -> vector<16x64xf32>
    %223 = vector.broadcast %147 : vector<1x64xf32> to vector<16x64xf32>
    %224 = arith.addf %222, %223 : vector<16x64xf32>
    %225 = arith.addf %140, %224 : vector<16x64xf32>
    %cst_73 = arith.constant dense<0.000000e+00> : vector<16xf32>
    %226 = vector.multi_reduction <add>, %225, %cst_73 [1] : vector<16x64xf32> to vector<16xf32>
    %227 = vector.shape_cast %226 : vector<16xf32> to vector<16x1xf32>
    %cst_74 = arith.constant 6.400000e+01 : f32
    %228 = vector.broadcast %cst_74 : f32 to vector<16x1xf32>
    %229 = arith.divf %227, %228 : vector<16x1xf32>
    %230 = vector.broadcast %229 : vector<16x1xf32> to vector<16x64xf32>
    %231 = arith.subf %225, %230 : vector<16x64xf32>
    %232 = arith.mulf %231, %231 : vector<16x64xf32>
    %cst_75 = arith.constant dense<0.000000e+00> : vector<16xf32>
    %233 = vector.multi_reduction <add>, %232, %cst_75 [1] : vector<16x64xf32> to vector<16xf32>
    %234 = vector.shape_cast %233 : vector<16xf32> to vector<16x1xf32>
    %cst_76 = arith.constant 6.400000e+01 : f32
    %235 = vector.broadcast %cst_76 : f32 to vector<16x1xf32>
    %236 = arith.divf %234, %235 : vector<16x1xf32>
    %237 = vector.broadcast %229 : vector<16x1xf32> to vector<16x64xf32>
    %238 = arith.subf %225, %237 : vector<16x64xf32>
    %cst_77 = arith.constant 9.99999997E-7 : f32
    %239 = vector.broadcast %cst_77 : f32 to vector<16x1xf32>
    %240 = arith.addf %236, %239 : vector<16x1xf32>
    %241 = math.rsqrt %240 : vector<16x1xf32>
    %242 = vector.broadcast %241 : vector<16x1xf32> to vector<16x64xf32>
    %243 = arith.mulf %238, %242 : vector<16x64xf32>
    %244 = vector.broadcast %145 : vector<1x64xf32> to vector<16x64xf32>
    %245 = arith.mulf %243, %244 : vector<16x64xf32>
    %246 = vector.broadcast %146 : vector<1x64xf32> to vector<16x64xf32>
    %247 = arith.addf %245, %246 : vector<16x64xf32>
    %248 = arith.truncf %247 : vector<16x64xf32> to vector<16x64xbf16>
    %c1_78 = arith.constant 1 : index
    %c0_79 = arith.constant 0 : index
    %c0_80 = arith.constant 0 : index
    %249 = vector.load %arg7[%c1_78, %c0_79, %c0_80] : memref<2x64x128xbf16, #tpu.memory_space<vmem>>, vector<1x64x128xbf16>
    %250 = vector.shape_cast %249 : vector<1x64x128xbf16> to vector<64x128xbf16>
    %cst_81 = arith.constant dense<0.000000e+00> : vector<16x128xf32>
    %251 = tpu.matmul %248, %250, %cst_81 {dimension_numbers = #tpu.dot_dimension_numbers<[1], [0], [0], [1], [0, 0, 1, 1], [], []>} : vector<16x64xbf16>, vector<64x128xbf16>, vector<16x128xf32> -> vector<16x128xf32>
    %c1_82 = arith.constant 1 : index
    %c0_83 = arith.constant 0 : index
    %c0_84 = arith.constant 0 : index
    %252 = vector.load %arg10[%c1_82, %c0_83, %c0_84] : memref<2x1x128xf32, #tpu.memory_space<vmem>>, vector<1x1x128xf32>
    %253 = vector.shape_cast %252 : vector<1x1x128xf32> to vector<1x128xf32>
    %254 = vector.broadcast %253 : vector<1x128xf32> to vector<16x128xf32>
    %255 = arith.addf %251, %254 : vector<16x128xf32>
    %cst_85 = arith.constant 5.000000e-01 : f32
    %256 = vector.broadcast %cst_85 : f32 to vector<16x128xf32>
    %257 = arith.mulf %256, %255 : vector<16x128xf32>
    %cst_86 = arith.constant 4.471500e-02 : f32
    %258 = vector.broadcast %cst_86 : f32 to vector<16x128xf32>
    %259 = arith.mulf %258, %255 : vector<16x128xf32>
    %260 = arith.mulf %259, %255 : vector<16x128xf32>
    %261 = arith.mulf %260, %255 : vector<16x128xf32>
    %262 = arith.addf %255, %261 : vector<16x128xf32>
    %cst_87 = arith.constant 0.797884583 : f32
    %263 = vector.broadcast %cst_87 : f32 to vector<16x128xf32>
    %264 = arith.mulf %263, %262 : vector<16x128xf32>
    %265 = math.tanh %264 : vector<16x128xf32>
    %cst_88 = arith.constant 1.000000e+00 : f32
    %266 = vector.broadcast %cst_88 : f32 to vector<16x128xf32>
    %267 = arith.addf %266, %265 : vector<16x128xf32>
    %268 = arith.mulf %257, %267 : vector<16x128xf32>
    %269 = arith.truncf %268 : vector<16x128xf32> to vector<16x128xbf16>
    %c1_89 = arith.constant 1 : index
    %c0_90 = arith.constant 0 : index
    %c0_91 = arith.constant 0 : index
    %270 = vector.load %arg8[%c1_89, %c0_90, %c0_91] : memref<2x128x64xbf16, #tpu.memory_space<vmem>>, vector<1x128x64xbf16>
    %271 = vector.shape_cast %270 : vector<1x128x64xbf16> to vector<128x64xbf16>
    %cst_92 = arith.constant dense<0.000000e+00> : vector<16x64xf32>
    %272 = tpu.matmul %269, %271, %cst_92 {dimension_numbers = #tpu.dot_dimension_numbers<[1], [0], [0], [1], [0, 0, 1, 1], [], []>} : vector<16x128xbf16>, vector<128x64xbf16>, vector<16x64xf32> -> vector<16x64xf32>
    %273 = vector.broadcast %148 : vector<1x64xf32> to vector<16x64xf32>
    %274 = arith.addf %272, %273 : vector<16x64xf32>
    %275 = arith.addf %225, %274 : vector<16x64xf32>
    %c0_93 = arith.constant 0 : index
    %c0_94 = arith.constant 0 : index
    %276 = vector.load %arg11[%c0_93, %c0_94] : memref<2x64xf32, #tpu.memory_space<vmem>>, vector<2x64xf32>
    %277 = vector.extract_strided_slice %276 {offsets = [0, 0], sizes = [1, 64], strides = [1, 1]} : vector<2x64xf32> to vector<1x64xf32>
    %278 = vector.extract_strided_slice %276 {offsets = [1, 0], sizes = [1, 64], strides = [1, 1]} : vector<2x64xf32> to vector<1x64xf32>
    %cst_95 = arith.constant dense<0.000000e+00> : vector<16xf32>
    %279 = vector.multi_reduction <add>, %275, %cst_95 [1] : vector<16x64xf32> to vector<16xf32>
    %280 = vector.shape_cast %279 : vector<16xf32> to vector<16x1xf32>
    %cst_96 = arith.constant 6.400000e+01 : f32
    %281 = vector.broadcast %cst_96 : f32 to vector<16x1xf32>
    %282 = arith.divf %280, %281 : vector<16x1xf32>
    %283 = vector.broadcast %282 : vector<16x1xf32> to vector<16x64xf32>
    %284 = arith.subf %275, %283 : vector<16x64xf32>
    %285 = arith.mulf %284, %284 : vector<16x64xf32>
    %cst_97 = arith.constant dense<0.000000e+00> : vector<16xf32>
    %286 = vector.multi_reduction <add>, %285, %cst_97 [1] : vector<16x64xf32> to vector<16xf32>
    %287 = vector.shape_cast %286 : vector<16xf32> to vector<16x1xf32>
    %cst_98 = arith.constant 6.400000e+01 : f32
    %288 = vector.broadcast %cst_98 : f32 to vector<16x1xf32>
    %289 = arith.divf %287, %288 : vector<16x1xf32>
    %290 = vector.broadcast %282 : vector<16x1xf32> to vector<16x64xf32>
    %291 = arith.subf %275, %290 : vector<16x64xf32>
    %cst_99 = arith.constant 9.99999997E-7 : f32
    %292 = vector.broadcast %cst_99 : f32 to vector<16x1xf32>
    %293 = arith.addf %289, %292 : vector<16x1xf32>
    %294 = math.rsqrt %293 : vector<16x1xf32>
    %295 = vector.broadcast %294 : vector<16x1xf32> to vector<16x64xf32>
    %296 = arith.mulf %291, %295 : vector<16x64xf32>
    %297 = vector.broadcast %277 : vector<1x64xf32> to vector<16x64xf32>
    %298 = arith.mulf %296, %297 : vector<16x64xf32>
    %299 = vector.broadcast %278 : vector<1x64xf32> to vector<16x64xf32>
    %300 = arith.addf %298, %299 : vector<16x64xf32>
    %c0_100 = arith.constant 0 : index
    %c0_101 = arith.constant 0 : index
    %c0_102 = arith.constant 0 : index
    %301 = vector.load %arg12[%c0_100, %c0_101, %c0_102] : memref<1x16x64xf32, #tpu.memory_space<vmem>>, vector<1x16x64xf32>
    %302 = vector.shape_cast %301 : vector<1x16x64xf32> to vector<16x64xf32>
    %303 = vector.shape_cast %300 : vector<16x64xf32> to vector<1x16x64xf32>
    tpu.vector_store %arg12[%c0_100, %c0_101, %c0_102], %303 {strides = array<i32>} : memref<1x16x64xf32, #tpu.memory_space<vmem>>, vector<1x16x64xf32>,
    return
  }
  func.func @transform_0(%arg0: i32) -> (i32, i32, i32) {
    %c0_i32 = arith.constant 0 : i32
    %c0_i32_0 = arith.constant 0 : i32
    %c0_i32_1 = arith.constant 0 : i32
    return %arg0, %c0_i32, %c0_i32_0 : i32, i32, i32
  }
  func.func @transform_1(%arg0: i32) -> (i32, i32) {
    %c0_i32 = arith.constant 0 : i32
    %c0_i32_0 = arith.constant 0 : i32
    %c0_i32_1 = arith.constant 0 : i32
    return %c0_i32, %c0_i32_0 : i32, i32
  }
  func.func @transform_2(%arg0: i32) -> (i32, i32) {
    %c0_i32 = arith.constant 0 : i32
    %c0_i32_0 = arith.constant 0 : i32
    %c0_i32_1 = arith.constant 0 : i32
    return %c0_i32, %c0_i32_0 : i32, i32
  }
  func.func @transform_3(%arg0: i32) -> (i32, i32, i32) {
    %c0_i32 = arith.constant 0 : i32
    %c0_i32_0 = arith.constant 0 : i32
    %c0_i32_1 = arith.constant 0 : i32
    %c0_i32_2 = arith.constant 0 : i32
    return %c0_i32, %c0_i32_0, %c0_i32_1 : i32, i32, i32
  }
  func.func @transform_4(%arg0: i32) -> (i32, i32, i32) {
    %c0_i32 = arith.constant 0 : i32
    %c0_i32_0 = arith.constant 0 : i32
    %c0_i32_1 = arith.constant 0 : i32
    %c0_i32_2 = arith.constant 0 : i32
    return %c0_i32, %c0_i32_0, %c0_i32_1 : i32, i32, i32
  }
  func.func @transform_5(%arg0: i32) -> (i32, i32, i32) {
    %c0_i32 = arith.constant 0 : i32
    %c0_i32_0 = arith.constant 0 : i32
    %c0_i32_1 = arith.constant 0 : i32
    %c0_i32_2 = arith.constant 0 : i32
    return %c0_i32, %c0_i32_0, %c0_i32_1 : i32, i32, i32
  }
  func.func @transform_6(%arg0: i32) -> (i32, i32, i32) {
    %c0_i32 = arith.constant 0 : i32
    %c0_i32_0 = arith.constant 0 : i32
    %c0_i32_1 = arith.constant 0 : i32
    %c0_i32_2 = arith.constant 0 : i32
    return %c0_i32, %c0_i32_0, %c0_i32_1 : i32, i32, i32
  }
  func.func @transform_7(%arg0: i32) -> (i32, i32, i32) {
    %c0_i32 = arith.constant 0 : i32
    %c0_i32_0 = arith.constant 0 : i32
    %c0_i32_1 = arith.constant 0 : i32
    %c0_i32_2 = arith.constant 0 : i32
    return %c0_i32, %c0_i32_0, %c0_i32_1 : i32, i32, i32
  }
  func.func @transform_8(%arg0: i32) -> (i32, i32, i32) {
    %c0_i32 = arith.constant 0 : i32
    %c0_i32_0 = arith.constant 0 : i32
    %c0_i32_1 = arith.constant 0 : i32
    %c0_i32_2 = arith.constant 0 : i32
    return %c0_i32, %c0_i32_0, %c0_i32_1 : i32, i32, i32
  }
  func.func @transform_9(%arg0: i32) -> (i32, i32, i32) {
    %c0_i32 = arith.constant 0 : i32
    %c0_i32_0 = arith.constant 0 : i32
    %c0_i32_1 = arith.constant 0 : i32
    %c0_i32_2 = arith.constant 0 : i32
    return %c0_i32, %c0_i32_0, %c0_i32_1 : i32, i32, i32
  }
  func.func @transform_10(%arg0: i32) -> (i32, i32) {
    %c0_i32 = arith.constant 0 : i32
    %c0_i32_0 = arith.constant 0 : i32
    %c0_i32_1 = arith.constant 0 : i32
    return %c0_i32, %c0_i32_0 : i32, i32
  }
  func.func @transform_11(%arg0: i32) -> (i32, i32, i32) {
    %c0_i32 = arith.constant 0 : i32
    %c0_i32_0 = arith.constant 0 : i32
    %c0_i32_1 = arith.constant 0 : i32
    return %arg0, %c0_i32, %c0_i32_0 : i32, i32, i32
  }
}

</mosaic_0001>

<llo_original>
// kernel: tpu_custom_call.1
$region0: #{tpu_custom_call.1}
  #allocation0 [shape = 'u32[]', space=smem, size = 0x4, offset = 0x4, fixed_abs, tag = 'smem constant byte address 0x4 - core index']
  #allocation1 [shape = 'u32[144,128]{1,0:T(1,128)}', space=vmem, size = 0x12000, scoped, tag = 'internal scratch']
  %s0 = inlined_call_operand.vmem [shape: bf16[2,16,192], index: 0, kind: input, shape index: {}]
  %s1 = inlined_call_operand.vmem [shape: bf16[192,64], index: 1, kind: input, shape index: {}]
  %s2 = inlined_call_operand.vmem [shape: f32[16,64], index: 2, kind: input, shape index: {}]
  %s3 = inlined_call_operand.vmem [shape: bf16[2,64,192], index: 3, kind: input, shape index: {}]
  %s4 = inlined_call_operand.vmem [shape: f32[2,1,192], index: 4, kind: input, shape index: {}]
  %s5 = inlined_call_operand.vmem [shape: bf16[2,64,64], index: 5, kind: input, shape index: {}]
  %s6 = inlined_call_operand.vmem [shape: bf16[2,64,128], index: 6, kind: input, shape index: {}]
  %s7 = inlined_call_operand.vmem [shape: bf16[2,128,64], index: 7, kind: input, shape index: {}]
  %s8 = inlined_call_operand.vmem [shape: f32[2,6,64], index: 8, kind: input, shape index: {}]
  %s9 = inlined_call_operand.vmem [shape: f32[2,1,128], index: 9, kind: input, shape index: {}]
  %s10 = inlined_call_operand.vmem [shape: f32[2,64], index: 10, kind: input, shape index: {}]
  %s11 = inlined_call_operand.hbm [shape: f32[2,16,64], index: 11, kind: output, shape index: {}]
  %s12 = sld [smem:[#allocation0]]
  $region77: #{tpu_custom_call.1} parent=0
    _
  %s14 = ssub.s32 1, %s12
  %s15 = scalar_select 0, %s14, %s12
  $region1: #{tpu_custom_call.1} parent=0
    #allocation2 [shape = 'u8[16384]{0}', space=vmem, size = 0x4000, scoped, tag = 'output window, operand 0']
    #allocation3 [shape = 's32[2]{0}', space=sflag, size = 0x8, scoped, tag = 'scoped memory for tpu_custom_call.1']
    %16 = vsyncpa [#allocation3], 0
    %s17 = scalar_lea.sflag [#allocation3], 1
    %18 = vsyncpa %s17, 0
    loop: start=0, step=1, limit=4
    $region2: #{tpu_custom_call.1} parent=1 // loop_pre_header
      _
    $region3: #{tpu_custom_call.1} parent=1 // loop_header
      %s20 = sphi 0, %s24
      %p21 = scmp.ge.s32.totalorder %s20, 4
      %s30 = sphi 0, %s32
      %s33 = sphi 0, %s30
      %s34 = sphi 0, %s33
      %s50 = sphi 0, %s34
      %s54 = sphi 0, %s54
      %s56 = sphi 0, %s54
      %s57 = sphi 0, %s56
      %s71 = sphi 0, %s57
      %s75 = sphi 0, %s75
      %s77 = sphi 0, %s75
      %s78 = sphi 0, %s77
      %s92 = sphi 0, %s78
      %s96 = sphi 0, %s96
      %s98 = sphi 0, %s96
      %s99 = sphi 0, %s98
      %s113 = sphi 0, %s99
      %s117 = sphi 0, %s117
      %s119 = sphi 0, %s117
      %s120 = sphi 0, %s119
      %s134 = sphi 0, %s120
      %s138 = sphi 0, %s138
      %s140 = sphi 0, %s138
      %s141 = sphi 0, %s140
      %s155 = sphi 0, %s141
      %s159 = sphi 0, %s159
      %s161 = sphi 0, %s159
      %s162 = sphi 0, %s161
      %s176 = sphi 0, %s162
      %s180 = sphi 0, %s180
      %s182 = sphi 0, %s180
      %s183 = sphi 0, %s182
      %s197 = sphi 0, %s183
      %s201 = sphi 0, %s201
      %s203 = sphi 0, %s201
      %s204 = sphi 0, %s203
      %s218 = sphi 0, %s204
      %s222 = sphi 0, %s222
      %s224 = sphi 0, %s222
      %s225 = sphi 0, %s224
      %s239 = sphi 0, %s225
      %s243 = sphi 0, %s243
      %s245 = sphi 0, %s243
      %s246 = sphi 0, %s245
      %s260 = sphi 0, %s246
      %s266 = sphi 0, %s268
      %s269 = sphi 0, %s266
      %s270 = sphi 0, %s269
      %s286 = sphi 0, %s270
    $region4: #{tpu_custom_call.1} parent=1 // loop_header_branch
      %23 = sbr.rel (%p21) target = $region8
    $region5: #{tpu_custom_call.1} parent=1 // loop_body
      %s25 = ssub.s32 %s20, 1
      %s26 = ssub.s32 %s20, 2
      %s27 = sadd.s32 %s20, 1
      %s28 = ssub.s32 %s20, %s27
      %p29 = scmp.eq.s32.totalorder %s28, 0
      %s31 = sadd.s32 %s30, 1
      %s32 = scalar_select %p29, %s30, %s31
      %p35 = pneg %p29
      %p36 = scmp.eq.s32.totalorder %s20, 1
      %p37 = por %p35, %p36
      %p38 = scmp.ne.s32.totalorder %s30, %s33
      %p39 = scmp.eq.s32.totalorder %s20, 0
      %p40 = por %p38, %p39
      %p41 = scmp.ne.s32.totalorder %s30, %s33
      %p42 = scmp.eq.s32.totalorder %s25, 1
      %p43 = por %p41, %p42
      %p44 = scmp.ne.s32.totalorder %s33, %s34
      %p45 = scmp.eq.s32.totalorder %s25, 0
      %p46 = por %p44, %p45
      %p47 = scmp.ne.s32.totalorder %s33, %s34
      %p48 = scmp.eq.s32.totalorder %s26, 1
      %p49 = por %p47, %p48
      %p51 = scmp.ne.s32.totalorder %s34, %s50
      %p52 = scmp.eq.s32.totalorder %s26, 0
      %p53 = por %p51, %p52
      %s55 = sadd.s32 %s54, 1
      %p58 = scmp.eq.s32.totalorder %s20, 1
      %p59 = scmp.ne.s32.totalorder %s54, %s56
      %p60 = scmp.eq.s32.totalorder %s20, 0
      %p61 = por %p59, %p60
      %p62 = scmp.ne.s32.totalorder %s54, %s56
      %p63 = scmp.eq.s32.totalorder %s25, 1
      %p64 = por %p62, %p63
      %p65 = scmp.ne.s32.totalorder %s56, %s57
      %p66 = scmp.eq.s32.totalorder %s25, 0
      %p67 = por %p65, %p66
      %p68 = scmp.ne.s32.totalorder %s56, %s57
      %p69 = scmp.eq.s32.totalorder %s26, 1
      %p70 = por %p68, %p69
      %p72 = scmp.ne.s32.totalorder %s57, %s71
      %p73 = scmp.eq.s32.totalorder %s26, 0
      %p74 = por %p72, %p73
      %s76 = sadd.s32 %s75, 1
      %p79 = scmp.eq.s32.totalorder %s20, 1
      %p80 = scmp.ne.s32.totalorder %s75, %s77
      %p81 = scmp.eq.s32.totalorder %s20, 0
      %p82 = por %p80, %p81
      %p83 = scmp.ne.s32.totalorder %s75, %s77
      %p84 = scmp.eq.s32.totalorder %s25, 1
      %p85 = por %p83, %p84
      %p86 = scmp.ne.s32.totalorder %s77, %s78
      %p87 = scmp.eq.s32.totalorder %s25, 0
      %p88 = por %p86, %p87
      %p89 = scmp.ne.s32.totalorder %s77, %s78
      %p90 = scmp.eq.s32.totalorder %s26, 1
      %p91 = por %p89, %p90
      %p93 = scmp.ne.s32.totalorder %s78, %s92
      %p94 = scmp.eq.s32.totalorder %s26, 0
      %p95 = por %p93, %p94
      %s97 = sadd.s32 %s96, 1
      %p100 = scmp.eq.s32.totalorder %s20, 1
      %p101 = scmp.ne.s32.totalorder %s96, %s98
      %p102 = scmp.eq.s32.totalorder %s20, 0
      %p103 = por %p101, %p102
      %p104 = scmp.ne.s32.totalorder %s96, %s98
      %p105 = scmp.eq.s32.totalorder %s25, 1
      %p106 = por %p104, %p105
      %p107 = scmp.ne.s32.totalorder %s98, %s99
      %p108 = scmp.eq.s32.totalorder %s25, 0
      %p109 = por %p107, %p108
      %p110 = scmp.ne.s32.totalorder %s98, %s99
      %p111 = scmp.eq.s32.totalorder %s26, 1
      %p112 = por %p110, %p111
      %p114 = scmp.ne.s32.totalorder %s99, %s113
      %p115 = scmp.eq.s32.totalorder %s26, 0
      %p116 = por %p114, %p115
      %s118 = sadd.s32 %s117, 1
      %p121 = scmp.eq.s32.totalorder %s20, 1
      %p122 = scmp.ne.s32.totalorder %s117, %s119
      %p123 = scmp.eq.s32.totalorder %s20, 0
      %p124 = por %p122, %p123
      %p125 = scmp.ne.s32.totalorder %s117, %s119
      %p126 = scmp.eq.s32.totalorder %s25, 1
      %p127 = por %p125, %p126
      %p128 = scmp.ne.s32.totalorder %s119, %s120
      %p129 = scmp.eq.s32.totalorder %s25, 0
      %p130 = por %p128, %p129
      %p131 = scmp.ne.s32.totalorder %s119, %s120
      %p132 = scmp.eq.s32.totalorder %s26, 1
      %p133 = por %p131, %p132
      %p135 = scmp.ne.s32.totalorder %s120, %s134
      %p136 = scmp.eq.s32.totalorder %s26, 0
      %p137 = por %p135, %p136
      %s139 = sadd.s32 %s138, 1
      %p142 = scmp.eq.s32.totalorder %s20, 1
      %p143 = scmp.ne.s32.totalorder %s138, %s140
      %p144 = scmp.eq.s32.totalorder %s20, 0
      %p145 = por %p143, %p144
      %p146 = scmp.ne.s32.totalorder %s138, %s140
      %p147 = scmp.eq.s32.totalorder %s25, 1
      %p148 = por %p146, %p147
      %p149 = scmp.ne.s32.totalorder %s140, %s141
      %p150 = scmp.eq.s32.totalorder %s25, 0
      %p151 = por %p149, %p150
      %p152 = scmp.ne.s32.totalorder %s140, %s141
      %p153 = scmp.eq.s32.totalorder %s26, 1
      %p154 = por %p152, %p153
      %p156 = scmp.ne.s32.totalorder %s141, %s155
      %p157 = scmp.eq.s32.totalorder %s26, 0
      %p158 = por %p156, %p157
      %s160 = sadd.s32 %s159, 1
      %p163 = scmp.eq.s32.totalorder %s20, 1
      %p164 = scmp.ne.s32.totalorder %s159, %s161
      %p165 = scmp.eq.s32.totalorder %s20, 0
      %p166 = por %p164, %p165
      %p167 = scmp.ne.s32.totalorder %s159, %s161
      %p168 = scmp.eq.s32.totalorder %s25, 1
      %p169 = por %p167, %p168
      %p170 = scmp.ne.s32.totalorder %s161, %s162
      %p171 = scmp.eq.s32.totalorder %s25, 0
      %p172 = por %p170, %p171
      %p173 = scmp.ne.s32.totalorder %s161, %s162
      %p174 = scmp.eq.s32.totalorder %s26, 1
      %p175 = por %p173, %p174
      %p177 = scmp.ne.s32.totalorder %s162, %s176
      %p178 = scmp.eq.s32.totalorder %s26, 0
      %p179 = por %p177, %p178
      %s181 = sadd.s32 %s180, 1
      %p184 = scmp.eq.s32.totalorder %s20, 1
      %p185 = scmp.ne.s32.totalorder %s180, %s182
      %p186 = scmp.eq.s32.totalorder %s20, 0
      %p187 = por %p185, %p186
      %p188 = scmp.ne.s32.totalorder %s180, %s182
      %p189 = scmp.eq.s32.totalorder %s25, 1
      %p190 = por %p188, %p189
      %p191 = scmp.ne.s32.totalorder %s182, %s183
      %p192 = scmp.eq.s32.totalorder %s25, 0
      %p193 = por %p191, %p192
      %p194 = scmp.ne.s32.totalorder %s182, %s183
      %p195 = scmp.eq.s32.totalorder %s26, 1
      %p196 = por %p194, %p195
      %p198 = scmp.ne.s32.totalorder %s183, %s197
      %p199 = scmp.eq.s32.totalorder %s26, 0
      %p200 = por %p198, %p199
      %s202 = sadd.s32 %s201, 1
      %p205 = scmp.eq.s32.totalorder %s20, 1
      %p206 = scmp.ne.s32.totalorder %s201, %s203
      %p207 = scmp.eq.s32.totalorder %s20, 0
      %p208 = por %p206, %p207
      %p209 = scmp.ne.s32.totalorder %s201, %s203
      %p210 = scmp.eq.s32.totalorder %s25, 1
      %p211 = por %p209, %p210
      %p212 = scmp.ne.s32.totalorder %s203, %s204
      %p213 = scmp.eq.s32.totalorder %s25, 0
      %p214 = por %p212, %p213
      %p215 = scmp.ne.s32.totalorder %s203, %s204
      %p216 = scmp.eq.s32.totalorder %s26, 1
      %p217 = por %p215, %p216
      %p219 = scmp.ne.s32.totalorder %s204, %s218
      %p220 = scmp.eq.s32.totalorder %s26, 0
      %p221 = por %p219, %p220
      %s223 = sadd.s32 %s222, 1
      %p226 = scmp.eq.s32.totalorder %s20, 1
      %p227 = scmp.ne.s32.totalorder %s222, %s224
      %p228 = scmp.eq.s32.totalorder %s20, 0
      %p229 = por %p227, %p228
      %p230 = scmp.ne.s32.totalorder %s222, %s224
      %p231 = scmp.eq.s32.totalorder %s25, 1
      %p232 = por %p230, %p231
      %p233 = scmp.ne.s32.totalorder %s224, %s225
      %p234 = scmp.eq.s32.totalorder %s25, 0
      %p235 = por %p233, %p234
      %p236 = scmp.ne.s32.totalorder %s224, %s225
      %p237 = scmp.eq.s32.totalorder %s26, 1
      %p238 = por %p236, %p237
      %p240 = scmp.ne.s32.totalorder %s225, %s239
      %p241 = scmp.eq.s32.totalorder %s26, 0
      %p242 = por %p240, %p241
      %s244 = sadd.s32 %s243, 1
      %p247 = scmp.eq.s32.totalorder %s20, 1
      %p248 = scmp.ne.s32.totalorder %s243, %s245
      %p249 = scmp.eq.s32.totalorder %s20, 0
      %p250 = por %p248, %p249
      %p251 = scmp.ne.s32.totalorder %s243, %s245
      %p252 = scmp.eq.s32.totalorder %s25, 1
      %p253 = por %p251, %p252
      %p254 = scmp.ne.s32.totalorder %s245, %s246
      %p255 = scmp.eq.s32.totalorder %s25, 0
      %p256 = por %p254, %p255
      %p257 = scmp.ne.s32.totalorder %s245, %s246
      %p258 = scmp.eq.s32.totalorder %s26, 1
      %p259 = por %p257, %p258
      %p261 = scmp.ne.s32.totalorder %s246, %s260
      %p262 = scmp.eq.s32.totalorder %s26, 0
      %p263 = por %p261, %p262
      %s264 = ssub.s32 %s20, %s27
      %p265 = scmp.eq.s32.totalorder %s264, 0
      %s267 = sadd.s32 %s266, 1
      %s268 = scalar_select %p265, %s266, %s267
      %p271 = pneg %p265
      %p272 = scmp.eq.s32.totalorder %s20, 1
      %p273 = por %p271, %p272
      %p274 = scmp.ne.s32.totalorder %s266, %s269
      %p275 = scmp.eq.s32.totalorder %s20, 0
      %p276 = por %p274, %p275
      %p277 = scmp.ne.s32.totalorder %s266, %s269
      %p278 = scmp.eq.s32.totalorder %s25, 1
      %p279 = por %p277, %p278
      %p280 = scmp.ne.s32.totalorder %s269, %s270
      %p281 = scmp.eq.s32.totalorder %s25, 0
      %p282 = por %p280, %p281
      %p283 = scmp.ne.s32.totalorder %s269, %s270
      %p284 = scmp.eq.s32.totalorder %s26, 1
      %p285 = por %p283, %p284
      %p287 = scmp.ne.s32.totalorder %s270, %s286
      %p288 = scmp.eq.s32.totalorder %s26, 0
      %p289 = por %p287, %p288
      %p290 = scmp.le.s32.totalorder 1, %s20
      %p291 = scmp.lt.s32.totalorder %s20, 3
      %p292 = pnand %p290, %p291
      %p293 = pneg %p292
      // Predicated region
      $region9: #{tpu_custom_call.1} parent=5 // pred_check
        _
      $region10: #{tpu_custom_call.1} parent=5 // pred_check_branch
        %295 = sbr.rel (%p292) target = $region12
      $region11: #{tpu_custom_call.1} parent=5 // pred_region
        %s296 = ssub.s32 %s20, 1
        // Predicated region
        $region13: #{tpu_custom_call.1} parent=11 // pred_check
          %p297 = pneg %p67
        $region14: #{tpu_custom_call.1} parent=11 // pred_check_branch
          %299 = sbr.rel (%p297) target = $region16
        $region15: #{tpu_custom_call.1} parent=11 // pred_region
          _
        $region16: #{tpu_custom_call.1} parent=11 // pred_fallthru
          _
        // Predicated region
        $region17: #{tpu_custom_call.1} parent=11 // pred_check
          %p300 = pneg %p88
        $region18: #{tpu_custom_call.1} parent=11 // pred_check_branch
          %302 = sbr.rel (%p300) target = $region20
        $region19: #{tpu_custom_call.1} parent=11 // pred_region
          _
        $region20: #{tpu_custom_call.1} parent=11 // pred_fallthru
          _
        // Predicated region
        $region21: #{tpu_custom_call.1} parent=11 // pred_check
          %p303 = pneg %p109
        $region22: #{tpu_custom_call.1} parent=11 // pred_check_branch
          %305 = sbr.rel (%p303) target = $region24
        $region23: #{tpu_custom_call.1} parent=11 // pred_region
          _
        $region24: #{tpu_custom_call.1} parent=11 // pred_fallthru
          _
        // Predicated region
        $region25: #{tpu_custom_call.1} parent=11 // pred_check
          %p306 = pneg %p130
        $region26: #{tpu_custom_call.1} parent=11 // pred_check_branch
          %308 = sbr.rel (%p306) target = $region28
        $region27: #{tpu_custom_call.1} parent=11 // pred_region
          _
        $region28: #{tpu_custom_call.1} parent=11 // pred_fallthru
          _
        // Predicated region
        $region29: #{tpu_custom_call.1} parent=11 // pred_check
          %p309 = pneg %p151
        $region30: #{tpu_custom_call.1} parent=11 // pred_check_branch
          %311 = sbr.rel (%p309) target = $region32
        $region31: #{tpu_custom_call.1} parent=11 // pred_region
          _
        $region32: #{tpu_custom_call.1} parent=11 // pred_fallthru
          _
        // Predicated region
        $region33: #{tpu_custom_call.1} parent=11 // pred_check
          %p312 = pneg %p172
        $region34: #{tpu_custom_call.1} parent=11 // pred_check_branch
          %314 = sbr.rel (%p312) target = $region36
        $region35: #{tpu_custom_call.1} parent=11 // pred_region
          _
        $region36: #{tpu_custom_call.1} parent=11 // pred_fallthru
          _
        // Predicated region
        $region37: #{tpu_custom_call.1} parent=11 // pred_check
          %p315 = pneg %p193
        $region38: #{tpu_custom_call.1} parent=11 // pred_check_branch
          %317 = sbr.rel (%p315) target = $region40
        $region39: #{tpu_custom_call.1} parent=11 // pred_region
          _
        $region40: #{tpu_custom_call.1} parent=11 // pred_fallthru
          _
        // Predicated region
        $region41: #{tpu_custom_call.1} parent=11 // pred_check
          %p318 = pneg %p214
        $region42: #{tpu_custom_call.1} parent=11 // pred_check_branch
          %320 = sbr.rel (%p318) target = $region44
        $region43: #{tpu_custom_call.1} parent=11 // pred_region
          _
        $region44: #{tpu_custom_call.1} parent=11 // pred_fallthru
          _
        // Predicated region
        $region45: #{tpu_custom_call.1} parent=11 // pred_check
          %p321 = pneg %p235
        $region46: #{tpu_custom_call.1} parent=11 // pred_check_branch
          %323 = sbr.rel (%p321) target = $region48
        $region47: #{tpu_custom_call.1} parent=11 // pred_region
          _
        $region48: #{tpu_custom_call.1} parent=11 // pred_fallthru
          _
        // Predicated region
        $region49: #{tpu_custom_call.1} parent=11 // pred_check
          %p324 = pneg %p256
        $region50: #{tpu_custom_call.1} parent=11 // pred_check_branch
          %326 = sbr.rel (%p324) target = $region52
        $region51: #{tpu_custom_call.1} parent=11 // pred_region
          _
        $region52: #{tpu_custom_call.1} parent=11 // pred_fallthru
          _
      $region12: #{tpu_custom_call.1} parent=5 // pred_fallthru
        _
      %p327 = scmp.lt.s32.totalorder %s20, 2
      // Predicated region
      $region53: #{tpu_custom_call.1} parent=5 // pred_check
        %p328 = pneg %p327
      $region54: #{tpu_custom_call.1} parent=5 // pred_check_branch
        %330 = sbr.rel (%p328) target = $region56
      $region55: #{tpu_custom_call.1} parent=5 // pred_region
        // Predicated region
        $region57: #{tpu_custom_call.1} parent=55 // pred_check
          %p331 = pneg %p40
        $region58: #{tpu_custom_call.1} parent=55 // pred_check_branch
          %333 = sbr.rel (%p331) target = $region60
        $region59: #{tpu_custom_call.1} parent=55 // pred_region
          %p334 = scmp.lt.s32.totalorder %s20, 1
          %s335 = scalar_select %p334, %s20, 1
          %s336 = smul.addr %s335, 4
          %s337 = smul.addr %s336, 4
          %s338 = scalar_lea.vmem %s0, %s337
        $region60: #{tpu_custom_call.1} parent=55 // pred_fallthru
          _
      $region56: #{tpu_custom_call.1} parent=5 // pred_fallthru
        _
      %p339 = scmp.le.s32.totalorder 1, %s20
      %p340 = scmp.lt.s32.totalorder %s20, 3
      %p341 = pnand %p339, %p340
      %p342 = pneg %p341
      // Predicated region
      $region61: #{tpu_custom_call.1} parent=5 // pred_check
        _
      $region62: #{tpu_custom_call.1} parent=5 // pred_check_branch
        %344 = sbr.rel (%p341) target = $region64
      $region63: #{tpu_custom_call.1} parent=5 // pred_region
        %s345 = ssub.s32 %s20, 1
        %p346 = scmp.lt.s32.totalorder %s25, 1
        %s347 = scalar_select %p346, %s25, 1
        %s348 = smul.addr %s347, 4
        %s349 = smul.addr %s348, 4
        %s350 = scalar_lea.vmem %s0, %s349
        %p351 = pneg %p46
        %p352 = pneg %p43
        %p353 = pneg %p67
        %p354 = pneg %p64
        %p355 = pneg %p88
        %p356 = pneg %p85
        %p357 = pneg %p109
        %p358 = pneg %p106
        %p359 = pneg %p130
        %p360 = pneg %p127
        %p361 = pneg %p151
        %p362 = pneg %p148
        %p363 = pneg %p172
        %p364 = pneg %p169
        %p365 = pneg %p193
        %p366 = pneg %p190
        %p367 = pneg %p214
        %p368 = pneg %p211
        %p369 = pneg %p235
        %p370 = pneg %p232
        %p371 = pneg %p256
        %p372 = pneg %p253
        %p373 = pneg %p282
        %p374 = pneg %p279
        %s375 = sand.u32 %s269, 1
        %s376 = scalar_lea.sflag [#allocation3], %s375
        %s377 = sand.u32 %s269, 1
        %s378 = smul.addr %s377, 16
        %s379 = scalar_lea.vmem [#allocation2], %s378
        %p380 = scmp.lt.s32.totalorder %s25, 1
        %s381 = scalar_select %p380, %s25, 1
        %s382 = smul.addr %s381, 4
        %s383 = smul.addr %s382, 4
        %s384 = scalar_lea.vmem %s0, %s383
        %v386 = vld [vmem:[%s384] sm:$0xff]
        %v387 = vld [vmem:[%s384 + $0x8] sm:$0xff]
        %v388 = vld [vmem:[%s1] sm:$0xf]
        %v389 = vld [vmem:[%s1 + $0x4] sm:$0xf]
        %v390 = vld [vmem:[%s1 + $0x8] sm:$0xf]
        %v391 = vld [vmem:[%s1 + $0xc] sm:$0xf]
        %v392 = vld [vmem:[%s1 + $0x10] sm:$0xf]
        %v393 = vld [vmem:[%s1 + $0x14] sm:$0xf]
        %v394 = vld [vmem:[%s1 + $0x18] sm:$0xf]
        %v395 = vld [vmem:[%s1 + $0x1c] sm:$0xf]
        %v396 = vld [vmem:[%s1 + $0x20] sm:$0xf]
        %v397 = vld [vmem:[%s1 + $0x24] sm:$0xf]
        %v398 = vld [vmem:[%s1 + $0x28] sm:$0xf]
        %v399 = vld [vmem:[%s1 + $0x2c] sm:$0xf]
        %v400 = vld [vmem:[%s1 + $0x30] sm:$0xf]
        %v401 = vld [vmem:[%s1 + $0x34] sm:$0xf]
        %v402 = vld [vmem:[%s1 + $0x38] sm:$0xf]
        %v403 = vld [vmem:[%s1 + $0x3c] sm:$0xf]
        %v404 = vld [vmem:[%s1 + $0x40] sm:$0xf]
        %v405 = vld [vmem:[%s1 + $0x44] sm:$0xf]
        %v406 = vld [vmem:[%s1 + $0x48] sm:$0xf]
        %v407 = vld [vmem:[%s1 + $0x4c] sm:$0xf]
        %v408 = vld [vmem:[%s1 + $0x50] sm:$0xf]
        %v409 = vld [vmem:[%s1 + $0x54] sm:$0xf]
        %v410 = vld [vmem:[%s1 + $0x58] sm:$0xf]
        %v411 = vld [vmem:[%s1 + $0x5c] sm:$0xf]
        %v412 = vld [vmem:[%s2] sm:$0xff]
        %v413 = vld [vmem:[%s2 + $0x8] sm:$0xff]
        %v416 = vunpack.c.l.b16 %v386
        %v417 = vunpack.c.h.b16 %v386
        %v418 = vunpack.c.l.b16 %v387
        %v419 = vunpack.c.h.b16 %v387
        %v420 = vpack.c.b16 %v418, %v416
        %v421 = vpack.c.b16 %v419, %v417
        %v447 = vunpack.c.l.b16 %v388
        %v448 = vunpack.c.l.b16 %v389
        %v449 = vunpack.c.l.b16 %v390
        %v450 = vunpack.c.l.b16 %v391
        %v451 = vunpack.c.l.b16 %v392
        %v452 = vunpack.c.l.b16 %v393
        %v453 = vunpack.c.l.b16 %v394
        %v454 = vunpack.c.l.b16 %v395
        %v455 = vunpack.c.l.b16 %v396
        %v456 = vunpack.c.l.b16 %v397
        %v457 = vunpack.c.l.b16 %v398
        %v458 = vunpack.c.l.b16 %v399
        %v459 = vunpack.c.l.b16 %v400
        %v460 = vunpack.c.l.b16 %v401
        %v461 = vunpack.c.l.b16 %v402
        %v462 = vunpack.c.l.b16 %v403
        %v463 = vunpack.c.l.b16 %v404
        %v464 = vunpack.c.l.b16 %v405
        %v465 = vunpack.c.l.b16 %v406
        %v466 = vunpack.c.l.b16 %v407
        %v467 = vunpack.c.l.b16 %v408
        %v468 = vunpack.c.l.b16 %v409
        %v469 = vunpack.c.l.b16 %v410
        %v470 = vunpack.c.l.b16 %v411
        %v471 = vpack.c.b16 %v448, %v447
        %v472 = vpack.c.b16 %v450, %v449
        %v473 = vpack.c.b16 %v452, %v451
        %v474 = vpack.c.b16 %v454, %v453
        %v475 = vpack.c.b16 %v456, %v455
        %v476 = vpack.c.b16 %v458, %v457
        %v477 = vpack.c.b16 %v460, %v459
        %v478 = vpack.c.b16 %v462, %v461
        %v479 = vpack.c.b16 %v464, %v463
        %v480 = vpack.c.b16 %v466, %v465
        %v481 = vpack.c.b16 %v468, %v467
        %v482 = vpack.c.b16 %v470, %v469
        %vm495 = vcmask 523264
        %v497 = vsel %vm495, %v421, 0
        %499 = vmatprep.subr.bf16.mxu0 0
        %500 = vmatpush1.bf16.msra.mxu0 %v471
        %501 = vmatprep.subr.bf16.mxu0 0
        %502 = vmatpush1.bf16.msra.mxu0 %v472
        %503 = vmatprep.subr.bf16.mxu0 0
        %504 = vmatpush1.bf16.msra.mxu0 %v473
        %505 = vmatprep.subr.bf16.mxu0 0
        %506 = vmatpush1.bf16.msra.mxu0 %v474
        %507 = vmatprep.subr.bf16.mxu0 0
        %508 = vmatpush1.bf16.msra.mxu0 %v475
        %509 = vmatprep.subr.bf16.mxu0 0
        %510 = vmatpush1.bf16.msra.mxu0 %v476
        %511 = vmatprep.subr.bf16.mxu0 0
        %512 = vmatpush1.bf16.msra.mxu0 %v477
        %513 = vmatprep.subr.bf16.mxu0 0
        %514 = vmatpush1.bf16.msra.mxu0 %v478
        %515 = vmatprep.subr.bf16.mxu0 0
        %516 = vmatpush1.bf16.msra.mxu0 %v479
        %517 = vmatprep.subr.bf16.mxu0 0
        %518 = vmatpush1.bf16.msra.mxu0 %v480
        %519 = vmatprep.subr.bf16.mxu0 0
        %520 = vmatpush1.bf16.msra.mxu0 %v481
        %521 = vmatprep.subr.bf16.mxu0 0
        %522 = vmatpush1.bf16.msra.mxu0 %v482
        %523 = vmatprep.subr.bf16.mxu0 0
        %524 = vmatpush1.bf16.msra.mxu0 0
        %525 = vmatprep.subr.bf16.mxu0 0
        %526 = vmatpush1.bf16.msra.mxu0 0
        %527 = vmatprep.subr.bf16.mxu0 0
        %528 = vmatpush1.bf16.msra.mxu0 0
        %529 = vmatprep.subr.bf16.mxu0 0
        %530 = vmatpush1.bf16.msra.mxu0 0
        %531 = vmatprep.mubr.bf16.mxu0 %v497
        %532 = vmatmul.mubr.bf16.gmra.mrb[0].mxu0 %v420
        %v533 = vpop.f32.mrb[0].mxu0
        %v534 = vadd.f32 %v412, %v533
        %v535 = vpop.f32.mrb[0].mxu0
        %v536 = vpop.f32.mrb[0].mxu0
        %v537 = vadd.f32 %v413, %v536
        %v538 = vpop.f32.mrb[0].mxu0
        %539 = vdwg.mxu0
        %v540 = vld [vmem:[%s8] sm:$0x3f]
        %v541 = vsel %vm495, %v534, 0.0
        %542 = vadd.xlane.f32.xlu0 %v541
        %v543 = vpop.xlane.xlu0 %542
        %v544 = vsel %vm495, %v537, 0.0
        %545 = vadd.xlane.f32.xlu0 %v544
        %v546 = vpop.xlane.xlu0 %545
        %v547 = vrcp.pop 64.0
        %v548 = vmul.f32 %v543, %v547
        %v549 = vmul.f32 %v546, %v547
        %v550 = vsub.f32 %v534, %v548
        %v551 = vsub.f32 %v537, %v549
        %v552 = vmul.f32 %v550, %v550
        %v553 = vmul.f32 %v551, %v551
        %v554 = vsel %vm495, %v552, 0.0
        %555 = vadd.xlane.f32.xlu0 %v554
        %v556 = vpop.xlane.xlu0 %555
        %v557 = vsel %vm495, %v553, 0.0
        %558 = vadd.xlane.f32.xlu0 %v557
        %v559 = vpop.xlane.xlu0 %558
        %v560 = vmul.f32 %v556, %v547
        %v561 = vmul.f32 %v559, %v547
        %v562 = vadd.f32 %v560, 1e-06
        %v563 = vadd.f32 %v561, 1e-06
        %v564 = vrsqrt.pop %v562
        %v565 = vrsqrt.pop %v563
        %v566 = vmul.f32 %v550, %v564
        %v567 = vmul.f32 %v551, %v565
        %v568 = vlaneseq
        %v569 = vshrl.u32 %v568, 7
        %v570 = vsub.s32 0, %v569
        %v571 = vrot.slane %v540, %v570
        %v572 = vmul.f32 %v566, %v571
        %v573 = vmul.f32 %v567, %v571
        %v574 = vlaneseq
        %v575 = vshrl.u32 %v574, 7
        %v576 = vsub.s32 1, %v575
        %v577 = vrot.slane %v540, %v576
        %v578 = vadd.f32 %v572, %v577
        %v579 = vadd.f32 %v573, %v577
        %v580 = vpack.c.bf16 %v579, %v578
        %v581 = vld [vmem:[%s3] sm:$0xff]
        %v582 = vld [vmem:[%s3 + $0x8] sm:$0xff]
        %v583 = vld [vmem:[%s3 + $0x10] sm:$0xff]
        %v584 = vld [vmem:[%s3 + $0x18] sm:$0xff]
        %v585 = vld [vmem:[%s3 + $0x20] sm:$0xff]
        %v586 = vld [vmem:[%s3 + $0x28] sm:$0xff]
        %v587 = vld [vmem:[%s3 + $0x30] sm:$0xff]
        %v588 = vld [vmem:[%s3 + $0x38] sm:$0xff]
        %v589 = vld [vmem:[%s4] sm:$0x3]
        %v591 = vlaneseq
        %v592 = vshrl.u32 %v591, 7
        %v593 = vsub.s32 0, %v592
        %v594 = vrot.slane %v589, %v593
        %v595 = vlaneseq
        %v596 = vshrl.u32 %v595, 7
        %v597 = vsub.s32 1, %v596
        %v598 = vrot.slane %v589, %v597
        %v609 = vunpack.c.l.b16 %v581
        %v610 = vunpack.c.h.b16 %v581
        %v611 = vunpack.c.l.b16 %v582
        %v612 = vunpack.c.h.b16 %v582
        %v613 = vunpack.c.l.b16 %v583
        %v614 = vunpack.c.h.b16 %v583
        %v615 = vunpack.c.l.b16 %v584
        %v616 = vunpack.c.h.b16 %v584
        %v617 = vunpack.c.l.b16 %v585
        %v618 = vunpack.c.h.b16 %v585
        %v619 = vunpack.c.l.b16 %v586
        %v620 = vunpack.c.h.b16 %v586
        %v621 = vunpack.c.l.b16 %v587
        %v622 = vunpack.c.h.b16 %v587
        %v623 = vunpack.c.l.b16 %v588
        %v624 = vunpack.c.h.b16 %v588
        %v625 = vpack.c.b16 %v611, %v609
        %v626 = vpack.c.b16 %v612, %v610
        %v627 = vpack.c.b16 %v615, %v613
        %v628 = vpack.c.b16 %v616, %v614
        %v629 = vpack.c.b16 %v619, %v617
        %v630 = vpack.c.b16 %v620, %v618
        %v631 = vpack.c.b16 %v623, %v621
        %v632 = vpack.c.b16 %v624, %v622
        %v642 = vsel %vm495, %v580, 0
        %644 = vmatprep.subr.bf16.mxu0 %v626
        %645 = vmatpush1.bf16.msra.mxu0 %v625
        %646 = vmatprep.subr.bf16.mxu0 %v628
        %647 = vmatpush1.bf16.msra.mxu0 %v627
        %648 = vmatprep.subr.bf16.mxu0 %v630
        %649 = vmatpush1.bf16.msra.mxu0 %v629
        %650 = vmatprep.subr.bf16.mxu0 %v632
        %651 = vmatpush1.bf16.msra.mxu0 %v631
        %652 = vmatprep.subr.bf16.mxu0 0
        %653 = vmatpush1.bf16.msra.mxu0 0
        %654 = vmatprep.subr.bf16.mxu0 0
        %655 = vmatpush1.bf16.msra.mxu0 0
        %656 = vmatprep.subr.bf16.mxu0 0
        %657 = vmatpush1.bf16.msra.mxu0 0
        %658 = vmatprep.subr.bf16.mxu0 0
        %659 = vmatpush1.bf16.msra.mxu0 0
        %660 = vmatprep.subr.bf16.mxu0 0
        %661 = vmatpush1.bf16.msra.mxu0 0
        %662 = vmatprep.subr.bf16.mxu0 0
        %663 = vmatpush1.bf16.msra.mxu0 0
        %664 = vmatprep.subr.bf16.mxu0 0
        %665 = vmatpush1.bf16.msra.mxu0 0
        %666 = vmatprep.subr.bf16.mxu0 0
        %667 = vmatpush1.bf16.msra.mxu0 0
        %668 = vmatprep.subr.bf16.mxu0 0
        %669 = vmatpush1.bf16.msra.mxu0 0
        %670 = vmatprep.subr.bf16.mxu0 0
        %671 = vmatpush1.bf16.msra.mxu0 0
        %672 = vmatprep.subr.bf16.mxu0 0
        %673 = vmatpush1.bf16.msra.mxu0 0
        %674 = vmatprep.subr.bf16.mxu0 0
        %675 = vmatpush1.bf16.msra.mxu0 0
        %676 = vmatprep.mubr.bf16.mxu0 0
        %677 = vmatmul.mubr.bf16.gmra.mrb[0].mxu0 %v642
        %v678 = vpop.f32.mrb[0].mxu0
        %v679 = vadd.f32 %v594, %v678
        %v680 = vpop.f32.mrb[0].mxu0
        %v681 = vadd.f32 %v598, %v680
        %v682 = vpop.f32.mrb[0].mxu0
        %v683 = vadd.f32 %v594, %v682
        %v684 = vpop.f32.mrb[0].mxu0
        %v685 = vadd.f32 %v598, %v684
        %686 = vdwg.mxu0
        %v687 = vmul.f32 %v679, 0.17677669
        %v688 = vmul.f32 %v683, 0.17677669
        %691 = vrot.lane.b32.xlu0 %v687, 96
        %v692 = vpop.permute.xlu0 %691
        %693 = vrot.lane.b32.xlu0 %v688, 96
        %v694 = vpop.permute.xlu0 %693
        %v697 = vpack.c.bf16 %v688, %v687
        %v698 = vpack.c.bf16 %v694, %v692
        %701 = vrot.lane.b32.xlu0 %v679, 96
        %v702 = vpop.permute.xlu0 %701
        %703 = vrot.lane.b32.xlu0 %v683, 96
        %v704 = vpop.permute.xlu0 %703
        %v707 = vpack.c.bf16 %v683, %v679
        %v708 = vpack.c.bf16 %v704, %v702
        %711 = vrot.lane.b32.xlu0 %v681, 96
        %v712 = vpop.permute.xlu0 %711
        %713 = vrot.lane.b32.xlu0 %v685, 96
        %v714 = vpop.permute.xlu0 %713
        %v717 = vpack.c.bf16 %v685, %v681
        %v718 = vpack.c.bf16 %v714, %v712
        %720 = vrot.lane.b32.xlu0 %v707, 64
        %v721 = vpop.permute.xlu0 %720
        %vm722 = vcmask 261120
        %v724 = vsel %vm722, %v697, 0
        %v727 = vsel %vm722, %v721, 0
        %729 = vmatprep.subr.bf16.mxu0 0
        %730 = vmatpush1.bf16.xpose.msra.mxu0 %v727
        %731 = vmatprep.subr.bf16.mxu0 0
        %732 = vmatpush1.bf16.xpose.msra.mxu0 0
        %733 = vmatprep.subr.bf16.mxu0 0
        %734 = vmatpush1.bf16.xpose.msra.mxu0 0
        %735 = vmatprep.subr.bf16.mxu0 0
        %736 = vmatpush1.bf16.xpose.msra.mxu0 0
        %737 = vmatprep.subr.bf16.mxu0 0
        %738 = vmatpush1.bf16.xpose.msra.mxu0 0
        %739 = vmatprep.subr.bf16.mxu0 0
        %740 = vmatpush1.bf16.xpose.msra.mxu0 0
        %741 = vmatprep.subr.bf16.mxu0 0
        %742 = vmatpush1.bf16.xpose.msra.mxu0 0
        %743 = vmatprep.subr.bf16.mxu0 0
        %744 = vmatpush1.bf16.xpose.msra.mxu0 0
        %745 = vmatprep.subr.bf16.mxu0 0
        %746 = vmatpush1.bf16.xpose.msra.mxu0 0
        %747 = vmatprep.subr.bf16.mxu0 0
        %748 = vmatpush1.bf16.xpose.msra.mxu0 0
        %749 = vmatprep.subr.bf16.mxu0 0
        %750 = vmatpush1.bf16.xpose.msra.mxu0 0
        %751 = vmatprep.subr.bf16.mxu0 0
        %752 = vmatpush1.bf16.xpose.msra.mxu0 0
        %753 = vmatprep.subr.bf16.mxu0 0
        %754 = vmatpush1.bf16.xpose.msra.mxu0 0
        %755 = vmatprep.subr.bf16.mxu0 0
        %756 = vmatpush1.bf16.xpose.msra.mxu0 0
        %757 = vmatprep.subr.bf16.mxu0 0
        %758 = vmatpush1.bf16.xpose.msra.mxu0 0
        %759 = vmatprep.subr.bf16.mxu0 0
        %760 = vmatpush1.bf16.xpose.msra.mxu0 0
        %761 = vmatprep.mubr.bf16.mxu0 0
        %762 = vmatmul.mubr.bf16.gmra.mrb[0].mxu0 %v724
        %v763 = vpop.f32.mrb[0].mxu0
        %v764 = vadd.f32 0.0, %v763
        %v765 = vpop.f32.mrb[0].mxu0
        %v766 = vpop.f32.mrb[0].mxu0
        %v767 = vadd.f32 0.0, %v766
        %v768 = vpop.f32.mrb[0].mxu0
        %769 = vdwg.mxu0
        %771 = vrot.lane.b32.xlu0 %v708, 64
        %v772 = vpop.permute.xlu0 %771
        %v774 = vsel %vm722, %v698, 0
        %v777 = vsel %vm722, %v772, 0
        %779 = vmatprep.subr.bf16.mxu0 0
        %780 = vmatpush1.bf16.xpose.msra.mxu0 %v777
        %781 = vmatprep.subr.bf16.mxu0 0
        %782 = vmatpush1.bf16.xpose.msra.mxu0 0
        %783 = vmatprep.subr.bf16.mxu0 0
        %784 = vmatpush1.bf16.xpose.msra.mxu0 0
        %785 = vmatprep.subr.bf16.mxu0 0
        %786 = vmatpush1.bf16.xpose.msra.mxu0 0
        %787 = vmatprep.subr.bf16.mxu0 0
        %788 = vmatpush1.bf16.xpose.msra.mxu0 0
        %789 = vmatprep.subr.bf16.mxu0 0
        %790 = vmatpush1.bf16.xpose.msra.mxu0 0
        %791 = vmatprep.subr.bf16.mxu0 0
        %792 = vmatpush1.bf16.xpose.msra.mxu0 0
        %793 = vmatprep.subr.bf16.mxu0 0
        %794 = vmatpush1.bf16.xpose.msra.mxu0 0
        %795 = vmatprep.subr.bf16.mxu0 0
        %796 = vmatpush1.bf16.xpose.msra.mxu0 0
        %797 = vmatprep.subr.bf16.mxu0 0
        %798 = vmatpush1.bf16.xpose.msra.mxu0 0
        %799 = vmatprep.subr.bf16.mxu0 0
        %800 = vmatpush1.bf16.xpose.msra.mxu0 0
        %801 = vmatprep.subr.bf16.mxu0 0
        %802 = vmatpush1.bf16.xpose.msra.mxu0 0
        %803 = vmatprep.subr.bf16.mxu0 0
        %804 = vmatpush1.bf16.xpose.msra.mxu0 0
        %805 = vmatprep.subr.bf16.mxu0 0
        %806 = vmatpush1.bf16.xpose.msra.mxu0 0
        %807 = vmatprep.subr.bf16.mxu0 0
        %808 = vmatpush1.bf16.xpose.msra.mxu0 0
        %809 = vmatprep.subr.bf16.mxu0 0
        %810 = vmatpush1.bf16.xpose.msra.mxu0 0
        %811 = vmatprep.mubr.bf16.mxu0 0
        %812 = vmatmul.mubr.bf16.gmra.mrb[0].mxu0 %v774
        %v813 = vpop.f32.mrb[0].mxu0
        %v814 = vadd.f32 0.0, %v813
        %v815 = vpop.f32.mrb[0].mxu0
        %v816 = vpop.f32.mrb[0].mxu0
        %v817 = vadd.f32 0.0, %v816
        %v818 = vpop.f32.mrb[0].mxu0
        %819 = vdwg.mxu0
        %vm820 = vcmask 130048
        %v821 = vsel %vm820, %v764, -inf
        %822 = vmax.xlane.f32.xlu0 %v821
        %v823 = vpop.xlane.xlu0 %822
        %v824 = vsel %vm820, %v767, -inf
        %825 = vmax.xlane.f32.xlu0 %v824
        %v826 = vpop.xlane.xlu0 %825
        %v827 = vsel %vm820, %v814, -inf
        %828 = vmax.xlane.f32.xlu0 %v827
        %v829 = vpop.xlane.xlu0 %828
        %v830 = vsel %vm820, %v817, -inf
        %831 = vmax.xlane.f32.xlu0 %v830
        %v832 = vpop.xlane.xlu0 %831
        %v833 = vsub.f32 %v764, %v823
        %v834 = vsub.f32 %v767, %v826
        %v835 = vsub.f32 %v814, %v829
        %v836 = vsub.f32 %v817, %v832
        %v837 = vmul.f32 %v833, 1.442695
        %v838 = vpow.pop %v837
        %v839 = vmul.f32 %v834, 1.442695
        %v840 = vpow.pop %v839
        %v841 = vmul.f32 %v835, 1.442695
        %v842 = vpow.pop %v841
        %v843 = vmul.f32 %v836, 1.442695
        %v844 = vpow.pop %v843
        %v845 = vsel %vm820, %v838, 0.0
        %846 = vadd.xlane.f32.xlu0 %v845
        %v847 = vpop.xlane.xlu0 %846
        %v848 = vsel %vm820, %v840, 0.0
        %849 = vadd.xlane.f32.xlu0 %v848
        %v850 = vpop.xlane.xlu0 %849
        %v851 = vsel %vm820, %v842, 0.0
        %852 = vadd.xlane.f32.xlu0 %v851
        %v853 = vpop.xlane.xlu0 %852
        %v854 = vsel %vm820, %v844, 0.0
        %855 = vadd.xlane.f32.xlu0 %v854
        %v856 = vpop.xlane.xlu0 %855
        %v857 = vrcp.pop %v847
        %v858 = vmul.f32 %v838, %v857
        %v859 = vrcp.pop %v850
        %v860 = vmul.f32 %v840, %v859
        %v861 = vrcp.pop %v853
        %v862 = vmul.f32 %v842, %v861
        %v863 = vrcp.pop %v856
        %v864 = vmul.f32 %v844, %v863
        %v865 = vpack.c.bf16 %v860, %v858
        %v866 = vpack.c.bf16 %v864, %v862
        %v868 = vsel %vm820, %v865, 0
        %870 = vmatprep.subr.bf16.mxu0 0
        %871 = vmatpush1.bf16.msra.mxu0 %v717
        %872 = vmatprep.subr.bf16.mxu0 0
        %873 = vmatpush1.bf16.msra.mxu0 0
        %874 = vmatprep.subr.bf16.mxu0 0
        %875 = vmatpush1.bf16.msra.mxu0 0
        %876 = vmatprep.subr.bf16.mxu0 0
        %877 = vmatpush1.bf16.msra.mxu0 0
        %878 = vmatprep.subr.bf16.mxu0 0
        %879 = vmatpush1.bf16.msra.mxu0 0
        %880 = vmatprep.subr.bf16.mxu0 0
        %881 = vmatpush1.bf16.msra.mxu0 0
        %882 = vmatprep.subr.bf16.mxu0 0
        %883 = vmatpush1.bf16.msra.mxu0 0
        %884 = vmatprep.subr.bf16.mxu0 0
        %885 = vmatpush1.bf16.msra.mxu0 0
        %886 = vmatprep.subr.bf16.mxu0 0
        %887 = vmatpush1.bf16.msra.mxu0 0
        %888 = vmatprep.subr.bf16.mxu0 0
        %889 = vmatpush1.bf16.msra.mxu0 0
        %890 = vmatprep.subr.bf16.mxu0 0
        %891 = vmatpush1.bf16.msra.mxu0 0
        %892 = vmatprep.subr.bf16.mxu0 0
        %893 = vmatpush1.bf16.msra.mxu0 0
        %894 = vmatprep.subr.bf16.mxu0 0
        %895 = vmatpush1.bf16.msra.mxu0 0
        %896 = vmatprep.subr.bf16.mxu0 0
        %897 = vmatpush1.bf16.msra.mxu0 0
        %898 = vmatprep.subr.bf16.mxu0 0
        %899 = vmatpush1.bf16.msra.mxu0 0
        %900 = vmatprep.subr.bf16.mxu0 0
        %901 = vmatpush1.bf16.msra.mxu0 0
        %902 = vmatprep.mubr.bf16.mxu0 0
        %903 = vmatmul.mubr.bf16.gmra.mrb[0].mxu0 %v868
        %v904 = vpop.f32.mrb[0].mxu0
        %v905 = vadd.f32 0.0, %v904
        %v906 = vpop.f32.mrb[0].mxu0
        %v907 = vpop.f32.mrb[0].mxu0
        %v908 = vadd.f32 0.0, %v907
        %v909 = vpop.f32.mrb[0].mxu0
        %910 = vdwg.mxu0
        %v912 = vsel %vm820, %v866, 0
        %914 = vmatprep.subr.bf16.mxu0 0
        %915 = vmatpush1.bf16.msra.mxu0 %v718
        %916 = vmatprep.subr.bf16.mxu0 0
        %917 = vmatpush1.bf16.msra.mxu0 0
        %918 = vmatprep.subr.bf16.mxu0 0
        %919 = vmatpush1.bf16.msra.mxu0 0
        %920 = vmatprep.subr.bf16.mxu0 0
        %921 = vmatpush1.bf16.msra.mxu0 0
        %922 = vmatprep.subr.bf16.mxu0 0
        %923 = vmatpush1.bf16.msra.mxu0 0
        %924 = vmatprep.subr.bf16.mxu0 0
        %925 = vmatpush1.bf16.msra.mxu0 0
        %926 = vmatprep.subr.bf16.mxu0 0
        %927 = vmatpush1.bf16.msra.mxu0 0
        %928 = vmatprep.subr.bf16.mxu0 0
        %929 = vmatpush1.bf16.msra.mxu0 0
        %930 = vmatprep.subr.bf16.mxu0 0
        %931 = vmatpush1.bf16.msra.mxu0 0
        %932 = vmatprep.subr.bf16.mxu0 0
        %933 = vmatpush1.bf16.msra.mxu0 0
        %934 = vmatprep.subr.bf16.mxu0 0
        %935 = vmatpush1.bf16.msra.mxu0 0
        %936 = vmatprep.subr.bf16.mxu0 0
        %937 = vmatpush1.bf16.msra.mxu0 0
        %938 = vmatprep.subr.bf16.mxu0 0
        %939 = vmatpush1.bf16.msra.mxu0 0
        %940 = vmatprep.subr.bf16.mxu0 0
        %941 = vmatpush1.bf16.msra.mxu0 0
        %942 = vmatprep.subr.bf16.mxu0 0
        %943 = vmatpush1.bf16.msra.mxu0 0
        %944 = vmatprep.subr.bf16.mxu0 0
        %945 = vmatpush1.bf16.msra.mxu0 0
        %946 = vmatprep.mubr.bf16.mxu0 0
        %947 = vmatmul.mubr.bf16.gmra.mrb[0].mxu0 %v912
        %v948 = vpop.f32.mrb[0].mxu0
        %v949 = vadd.f32 0.0, %v948
        %v950 = vpop.f32.mrb[0].mxu0
        %v951 = vpop.f32.mrb[0].mxu0
        %v952 = vadd.f32 0.0, %v951
        %v953 = vpop.f32.mrb[0].mxu0
        %954 = vdwg.mxu0
        %957 = vrot.lane.b32.xlu0 %v949, 32
        %v958 = vpop.permute.xlu0 %957
        %959 = vrot.lane.b32.xlu0 %v952, 32
        %v960 = vpop.permute.xlu0 %959
        %v963 = vsel %vm722, %v905, %v958
        %v964 = vsel %vm722, %v908, %v960
        %v965 = vpack.c.bf16 %v964, %v963
        %v966 = vld [vmem:[%s5] sm:$0xf]
        %v967 = vld [vmem:[%s5 + $0x4] sm:$0xf]
        %v968 = vld [vmem:[%s5 + $0x8] sm:$0xf]
        %v969 = vld [vmem:[%s5 + $0xc] sm:$0xf]
        %v970 = vld [vmem:[%s5 + $0x10] sm:$0xf]
        %v971 = vld [vmem:[%s5 + $0x14] sm:$0xf]
        %v972 = vld [vmem:[%s5 + $0x18] sm:$0xf]
        %v973 = vld [vmem:[%s5 + $0x1c] sm:$0xf]
        %v974 = vlaneseq
        %v975 = vshrl.u32 %v974, 7
        %v976 = vsub.s32 4, %v975
        %v977 = vrot.slane %v540, %v976
        %v986 = vunpack.c.l.b16 %v966
        %v987 = vunpack.c.l.b16 %v967
        %v988 = vunpack.c.l.b16 %v968
        %v989 = vunpack.c.l.b16 %v969
        %v990 = vunpack.c.l.b16 %v970
        %v991 = vunpack.c.l.b16 %v971
        %v992 = vunpack.c.l.b16 %v972
        %v993 = vunpack.c.l.b16 %v973
        %v994 = vpack.c.b16 %v987, %v986
        %v995 = vpack.c.b16 %v989, %v988
        %v996 = vpack.c.b16 %v991, %v990
        %v997 = vpack.c.b16 %v993, %v992
        %v1003 = vsel %vm495, %v965, 0
        %1005 = vmatprep.subr.bf16.mxu0 0
        %1006 = vmatpush1.bf16.msra.mxu0 %v994
        %1007 = vmatprep.subr.bf16.mxu0 0
        %1008 = vmatpush1.bf16.msra.mxu0 %v995
        %1009 = vmatprep.subr.bf16.mxu0 0
        %1010 = vmatpush1.bf16.msra.mxu0 %v996
        %1011 = vmatprep.subr.bf16.mxu0 0
        %1012 = vmatpush1.bf16.msra.mxu0 %v997
        %1013 = vmatprep.subr.bf16.mxu0 0
        %1014 = vmatpush1.bf16.msra.mxu0 0
        %1015 = vmatprep.subr.bf16.mxu0 0
        %1016 = vmatpush1.bf16.msra.mxu0 0
        %1017 = vmatprep.subr.bf16.mxu0 0
        %1018 = vmatpush1.bf16.msra.mxu0 0
        %1019 = vmatprep.subr.bf16.mxu0 0
        %1020 = vmatpush1.bf16.msra.mxu0 0
        %1021 = vmatprep.subr.bf16.mxu0 0
        %1022 = vmatpush1.bf16.msra.mxu0 0
        %1023 = vmatprep.subr.bf16.mxu0 0
        %1024 = vmatpush1.bf16.msra.mxu0 0
        %1025 = vmatprep.subr.bf16.mxu0 0
        %1026 = vmatpush1.bf16.msra.mxu0 0
        %1027 = vmatprep.subr.bf16.mxu0 0
        %1028 = vmatpush1.bf16.msra.mxu0 0
        %1029 = vmatprep.subr.bf16.mxu0 0
        %1030 = vmatpush1.bf16.msra.mxu0 0
        %1031 = vmatprep.subr.bf16.mxu0 0
        %1032 = vmatpush1.bf16.msra.mxu0 0
        %1033 = vmatprep.subr.bf16.mxu0 0
        %1034 = vmatpush1.bf16.msra.mxu0 0
        %1035 = vmatprep.subr.bf16.mxu0 0
        %1036 = vmatpush1.bf16.msra.mxu0 0
        %1037 = vmatprep.mubr.bf16.mxu0 0
        %1038 = vmatmul.mubr.bf16.gmra.mrb[0].mxu0 %v1003
        %v1039 = vpop.f32.mrb[0].mxu0
        %v1040 = vadd.f32 %v977, %v1039
        %v1041 = vpop.f32.mrb[0].mxu0
        %v1042 = vpop.f32.mrb[0].mxu0
        %v1043 = vadd.f32 %v977, %v1042
        %v1044 = vpop.f32.mrb[0].mxu0
        %1045 = vdwg.mxu0
        %v1046 = vadd.f32 %v534, %v1040
        %v1047 = vadd.f32 %v537, %v1043
        %v1048 = vsel %vm495, %v1046, 0.0
        %1049 = vadd.xlane.f32.xlu0 %v1048
        %v1050 = vpop.xlane.xlu0 %1049
        %v1051 = vsel %vm495, %v1047, 0.0
        %1052 = vadd.xlane.f32.xlu0 %v1051
        %v1053 = vpop.xlane.xlu0 %1052
        %v1054 = vmul.f32 %v1050, %v547
        %v1055 = vmul.f32 %v1053, %v547
        %v1056 = vsub.f32 %v1046, %v1054
        %v1057 = vsub.f32 %v1047, %v1055
        %v1058 = vmul.f32 %v1056, %v1056
        %v1059 = vmul.f32 %v1057, %v1057
        %v1060 = vsel %vm495, %v1058, 0.0
        %1061 = vadd.xlane.f32.xlu0 %v1060
        %v1062 = vpop.xlane.xlu0 %1061
        %v1063 = vsel %vm495, %v1059, 0.0
        %1064 = vadd.xlane.f32.xlu0 %v1063
        %v1065 = vpop.xlane.xlu0 %1064
        %v1066 = vmul.f32 %v1062, %v547
        %v1067 = vmul.f32 %v1065, %v547
        %v1068 = vadd.f32 %v1066, 1e-06
        %v1069 = vadd.f32 %v1067, 1e-06
        %v1070 = vrsqrt.pop %v1068
        %v1071 = vrsqrt.pop %v1069
        %v1072 = vmul.f32 %v1056, %v1070
        %v1073 = vmul.f32 %v1057, %v1071
        %v1074 = vlaneseq
        %v1075 = vshrl.u32 %v1074, 7
        %v1076 = vsub.s32 2, %v1075
        %v1077 = vrot.slane %v540, %v1076
        %v1078 = vmul.f32 %v1072, %v1077
        %v1079 = vmul.f32 %v1073, %v1077
        %v1080 = vlaneseq
        %v1081 = vshrl.u32 %v1080, 7
        %v1082 = vsub.s32 3, %v1081
        %v1083 = vrot.slane %v540, %v1082
        %v1084 = vadd.f32 %v1078, %v1083
        %v1085 = vadd.f32 %v1079, %v1083
        %v1086 = vpack.c.bf16 %v1085, %v1084
        %v1087 = vld [vmem:[%s6] sm:$0xf]
        %v1088 = vld [vmem:[%s6 + $0x4] sm:$0xf]
        %v1089 = vld [vmem:[%s6 + $0x8] sm:$0xf]
        %v1090 = vld [vmem:[%s6 + $0xc] sm:$0xf]
        %v1091 = vld [vmem:[%s6 + $0x10] sm:$0xf]
        %v1092 = vld [vmem:[%s6 + $0x14] sm:$0xf]
        %v1093 = vld [vmem:[%s6 + $0x18] sm:$0xf]
        %v1094 = vld [vmem:[%s6 + $0x1c] sm:$0xf]
        %v1095 = vld [vmem:[%s9] sm:$0x1]
        %v1097 = vlaneseq
        %v1098 = vshrl.u32 %v1097, 7
        %v1099 = vsub.s32 0, %v1098
        %v1100 = vrot.slane %v1095, %v1099
        %v1110 = vunpack.c.l.b16 %v1087
        %v1111 = vunpack.c.l.b16 %v1088
        %v1112 = vunpack.c.l.b16 %v1089
        %v1113 = vunpack.c.l.b16 %v1090
        %v1114 = vunpack.c.l.b16 %v1091
        %v1115 = vunpack.c.l.b16 %v1092
        %v1116 = vunpack.c.l.b16 %v1093
        %v1117 = vunpack.c.l.b16 %v1094
        %v1118 = vpack.c.b16 %v1111, %v1110
        %v1119 = vpack.c.b16 %v1113, %v1112
        %v1120 = vpack.c.b16 %v1115, %v1114
        %v1121 = vpack.c.b16 %v1117, %v1116
        %v1127 = vsel %vm495, %v1086, 0
        %1129 = vmatprep.subr.bf16.mxu0 0
        %1130 = vmatpush1.bf16.msra.mxu0 %v1118
        %1131 = vmatprep.subr.bf16.mxu0 0
        %1132 = vmatpush1.bf16.msra.mxu0 %v1119
        %1133 = vmatprep.subr.bf16.mxu0 0
        %1134 = vmatpush1.bf16.msra.mxu0 %v1120
        %1135 = vmatprep.subr.bf16.mxu0 0
        %1136 = vmatpush1.bf16.msra.mxu0 %v1121
        %1137 = vmatprep.subr.bf16.mxu0 0
        %1138 = vmatpush1.bf16.msra.mxu0 0
        %1139 = vmatprep.subr.bf16.mxu0 0
        %1140 = vmatpush1.bf16.msra.mxu0 0
        %1141 = vmatprep.subr.bf16.mxu0 0
        %1142 = vmatpush1.bf16.msra.mxu0 0
        %1143 = vmatprep.subr.bf16.mxu0 0
        %1144 = vmatpush1.bf16.msra.mxu0 0
        %1145 = vmatprep.subr.bf16.mxu0 0
        %1146 = vmatpush1.bf16.msra.mxu0 0
        %1147 = vmatprep.subr.bf16.mxu0 0
        %1148 = vmatpush1.bf16.msra.mxu0 0
        %1149 = vmatprep.subr.bf16.mxu0 0
        %1150 = vmatpush1.bf16.msra.mxu0 0
        %1151 = vmatprep.subr.bf16.mxu0 0
        %1152 = vmatpush1.bf16.msra.mxu0 0
        %1153 = vmatprep.subr.bf16.mxu0 0
        %1154 = vmatpush1.bf16.msra.mxu0 0
        %1155 = vmatprep.subr.bf16.mxu0 0
        %1156 = vmatpush1.bf16.msra.mxu0 0
        %1157 = vmatprep.subr.bf16.mxu0 0
        %1158 = vmatpush1.bf16.msra.mxu0 0
        %1159 = vmatprep.subr.bf16.mxu0 0
        %1160 = vmatpush1.bf16.msra.mxu0 0
        %1161 = vmatprep.mubr.bf16.mxu0 0
        %1162 = vmatmul.mubr.bf16.gmra.mrb[0].mxu0 %v1127
        %v1163 = vpop.f32.mrb[0].mxu0
        %v1164 = vadd.f32 %v1100, %v1163
        %v1165 = vpop.f32.mrb[0].mxu0
        %v1166 = vpop.f32.mrb[0].mxu0
        %v1167 = vadd.f32 %v1100, %v1166
        %v1168 = vpop.f32.mrb[0].mxu0
        %1169 = vdwg.mxu0
        %v1170 = vmul.f32 %v1164, 0.5
        %v1171 = vmul.f32 %v1167, 0.5
        %v1172 = vmul.f32 %v1164, 0.044715
        %v1173 = vmul.f32 %v1167, 0.044715
        %v1174 = vmul.f32 %v1172, %v1164
        %v1175 = vmul.f32 %v1173, %v1167
        %v1176 = vmul.f32 %v1174, %v1164
        %v1177 = vmul.f32 %v1175, %v1167
        %v1178 = vadd.f32 %v1164, %v1176
        %v1179 = vadd.f32 %v1167, %v1177
        %v1180 = vmul.f32 %v1178, 0.7978846
        %v1181 = vmul.f32 %v1179, 0.7978846
        %v1182 = vtanh.pop %v1180
        %v1183 = vtanh.pop %v1181
        %v1184 = vadd.f32 %v1182, 1.0
        %v1185 = vadd.f32 %v1183, 1.0
        %v1186 = vmul.f32 %v1170, %v1184
        %v1187 = vmul.f32 %v1171, %v1185
        %v1188 = vpack.c.bf16 %v1187, %v1186
        %v1189 = vld [vmem:[%s7] sm:$0xf]
        %v1190 = vld [vmem:[%s7 + $0x4] sm:$0xf]
        %v1191 = vld [vmem:[%s7 + $0x8] sm:$0xf]
        %v1192 = vld [vmem:[%s7 + $0xc] sm:$0xf]
        %v1193 = vld [vmem:[%s7 + $0x10] sm:$0xf]
        %v1194 = vld [vmem:[%s7 + $0x14] sm:$0xf]
        %v1195 = vld [vmem:[%s7 + $0x18] sm:$0xf]
        %v1196 = vld [vmem:[%s7 + $0x1c] sm:$0xf]
        %v1197 = vld [vmem:[%s7 + $0x20] sm:$0xf]
        %v1198 = vld [vmem:[%s7 + $0x24] sm:$0xf]
        %v1199 = vld [vmem:[%s7 + $0x28] sm:$0xf]
        %v1200 = vld [vmem:[%s7 + $0x2c] sm:$0xf]
        %v1201 = vld [vmem:[%s7 + $0x30] sm:$0xf]
        %v1202 = vld [vmem:[%s7 + $0x34] sm:$0xf]
        %v1203 = vld [vmem:[%s7 + $0x38] sm:$0xf]
        %v1204 = vld [vmem:[%s7 + $0x3c] sm:$0xf]
        %v1205 = vlaneseq
        %v1206 = vshrl.u32 %v1205, 7
        %v1207 = vsub.s32 5, %v1206
        %v1208 = vrot.slane %v540, %v1207
        %v1225 = vunpack.c.l.b16 %v1189
        %v1226 = vunpack.c.l.b16 %v1190
        %v1227 = vunpack.c.l.b16 %v1191
        %v1228 = vunpack.c.l.b16 %v1192
        %v1229 = vunpack.c.l.b16 %v1193
        %v1230 = vunpack.c.l.b16 %v1194
        %v1231 = vunpack.c.l.b16 %v1195
        %v1232 = vunpack.c.l.b16 %v1196
        %v1233 = vunpack.c.l.b16 %v1197
        %v1234 = vunpack.c.l.b16 %v1198
        %v1235 = vunpack.c.l.b16 %v1199
        %v1236 = vunpack.c.l.b16 %v1200
        %v1237 = vunpack.c.l.b16 %v1201
        %v1238 = vunpack.c.l.b16 %v1202
        %v1239 = vunpack.c.l.b16 %v1203
        %v1240 = vunpack.c.l.b16 %v1204
        %v1241 = vpack.c.b16 %v1226, %v1225
        %v1242 = vpack.c.b16 %v1228, %v1227
        %v1243 = vpack.c.b16 %v1230, %v1229
        %v1244 = vpack.c.b16 %v1232, %v1231
        %v1245 = vpack.c.b16 %v1234, %v1233
        %v1246 = vpack.c.b16 %v1236, %v1235
        %v1247 = vpack.c.b16 %v1238, %v1237
        %v1248 = vpack.c.b16 %v1240, %v1239
        %1257 = vmatprep.subr.bf16.mxu0 0
        %1258 = vmatpush1.bf16.msra.mxu0 %v1241
        %1259 = vmatprep.subr.bf16.mxu0 0
        %1260 = vmatpush1.bf16.msra.mxu0 %v1242
        %1261 = vmatprep.subr.bf16.mxu0 0
        %1262 = vmatpush1.bf16.msra.mxu0 %v1243
        %1263 = vmatprep.subr.bf16.mxu0 0
        %1264 = vmatpush1.bf16.msra.mxu0 %v1244
        %1265 = vmatprep.subr.bf16.mxu0 0
        %1266 = vmatpush1.bf16.msra.mxu0 %v1245
        %1267 = vmatprep.subr.bf16.mxu0 0
        %1268 = vmatpush1.bf16.msra.mxu0 %v1246
        %1269 = vmatprep.subr.bf16.mxu0 0
        %1270 = vmatpush1.bf16.msra.mxu0 %v1247
        %1271 = vmatprep.subr.bf16.mxu0 0
        %1272 = vmatpush1.bf16.msra.mxu0 %v1248
        %1273 = vmatprep.subr.bf16.mxu0 0
        %1274 = vmatpush1.bf16.msra.mxu0 0
        %1275 = vmatprep.subr.bf16.mxu0 0
        %1276 = vmatpush1.bf16.msra.mxu0 0
        %1277 = vmatprep.subr.bf16.mxu0 0
        %1278 = vmatpush1.bf16.msra.mxu0 0
        %1279 = vmatprep.subr.bf16.mxu0 0
        %1280 = vmatpush1.bf16.msra.mxu0 0
        %1281 = vmatprep.subr.bf16.mxu0 0
        %1282 = vmatpush1.bf16.msra.mxu0 0
        %1283 = vmatprep.subr.bf16.mxu0 0
        %1284 = vmatpush1.bf16.msra.mxu0 0
        %1285 = vmatprep.subr.bf16.mxu0 0
        %1286 = vmatpush1.bf16.msra.mxu0 0
        %1287 = vmatprep.subr.bf16.mxu0 0
        %1288 = vmatpush1.bf16.msra.mxu0 0
        %1289 = vmatprep.mubr.bf16.mxu0 0
        %1290 = vmatmul.mubr.bf16.gmra.mrb[0].mxu0 %v1188
        %v1291 = vpop.f32.mrb[0].mxu0
        %v1292 = vadd.f32 %v1208, %v1291
        %v1293 = vpop.f32.mrb[0].mxu0
        %v1294 = vpop.f32.mrb[0].mxu0
        %v1295 = vadd.f32 %v1208, %v1294
        %v1296 = vpop.f32.mrb[0].mxu0
        %1297 = vdwg.mxu0
        %v1298 = vadd.f32 %v1046, %v1292
        %v1299 = vadd.f32 %v1047, %v1295
        %s1300 = scalar_lea.vmem %s8, 8
        %v1301 = vld [vmem:[%s1300] sm:$0x3f]
        %v1302 = vsel %vm495, %v1298, 0.0
        %1303 = vadd.xlane.f32.xlu0 %v1302
        %v1304 = vpop.xlane.xlu0 %1303
        %v1305 = vsel %vm495, %v1299, 0.0
        %1306 = vadd.xlane.f32.xlu0 %v1305
        %v1307 = vpop.xlane.xlu0 %1306
        %v1308 = vmul.f32 %v1304, %v547
        %v1309 = vmul.f32 %v1307, %v547
        %v1310 = vsub.f32 %v1298, %v1308
        %v1311 = vsub.f32 %v1299, %v1309
        %v1312 = vmul.f32 %v1310, %v1310
        %v1313 = vmul.f32 %v1311, %v1311
        %v1314 = vsel %vm495, %v1312, 0.0
        %1315 = vadd.xlane.f32.xlu0 %v1314
        %v1316 = vpop.xlane.xlu0 %1315
        %v1317 = vsel %vm495, %v1313, 0.0
        %1318 = vadd.xlane.f32.xlu0 %v1317
        %v1319 = vpop.xlane.xlu0 %1318
        %v1320 = vmul.f32 %v1316, %v547
        %v1321 = vmul.f32 %v1319, %v547
        %v1322 = vadd.f32 %v1320, 1e-06
        %v1323 = vadd.f32 %v1321, 1e-06
        %v1324 = vrsqrt.pop %v1322
        %v1325 = vrsqrt.pop %v1323
        %v1326 = vmul.f32 %v1310, %v1324
        %v1327 = vmul.f32 %v1311, %v1325
        %v1328 = vlaneseq
        %v1329 = vshrl.u32 %v1328, 7
        %v1330 = vsub.s32 0, %v1329
        %v1331 = vrot.slane %v1301, %v1330
        %v1332 = vmul.f32 %v1326, %v1331
        %v1333 = vmul.f32 %v1327, %v1331
        %v1334 = vlaneseq
        %v1335 = vshrl.u32 %v1334, 7
        %v1336 = vsub.s32 1, %v1335
        %v1337 = vrot.slane %v1301, %v1336
        %v1338 = vadd.f32 %v1332, %v1337
        %v1339 = vadd.f32 %v1333, %v1337
        %v1340 = vpack.c.bf16 %v1339, %v1338
        %s1341 = scalar_lea.vmem %s3, 64
        %v1342 = vld [vmem:[%s1341] sm:$0xff]
        %v1343 = vld [vmem:[%s1341 + $0x8] sm:$0xff]
        %v1344 = vld [vmem:[%s1341 + $0x10] sm:$0xff]
        %v1345 = vld [vmem:[%s1341 + $0x18] sm:$0xff]
        %v1346 = vld [vmem:[%s1341 + $0x20] sm:$0xff]
        %v1347 = vld [vmem:[%s1341 + $0x28] sm:$0xff]
        %v1348 = vld [vmem:[%s1341 + $0x30] sm:$0xff]
        %v1349 = vld [vmem:[%s1341 + $0x38] sm:$0xff]
        %s1350 = scalar_lea.vmem %s4, 2
        %v1351 = vld [vmem:[%s1350] sm:$0x3]
        %v1353 = vlaneseq
        %v1354 = vshrl.u32 %v1353, 7
        %v1355 = vsub.s32 0, %v1354
        %v1356 = vrot.slane %v1351, %v1355
        %v1357 = vlaneseq
        %v1358 = vshrl.u32 %v1357, 7
        %v1359 = vsub.s32 1, %v1358
        %v1360 = vrot.slane %v1351, %v1359
        %v1371 = vunpack.c.l.b16 %v1342
        %v1372 = vunpack.c.h.b16 %v1342
        %v1373 = vunpack.c.l.b16 %v1343
        %v1374 = vunpack.c.h.b16 %v1343
        %v1375 = vunpack.c.l.b16 %v1344
        %v1376 = vunpack.c.h.b16 %v1344
        %v1377 = vunpack.c.l.b16 %v1345
        %v1378 = vunpack.c.h.b16 %v1345
        %v1379 = vunpack.c.l.b16 %v1346
        %v1380 = vunpack.c.h.b16 %v1346
        %v1381 = vunpack.c.l.b16 %v1347
        %v1382 = vunpack.c.h.b16 %v1347
        %v1383 = vunpack.c.l.b16 %v1348
        %v1384 = vunpack.c.h.b16 %v1348
        %v1385 = vunpack.c.l.b16 %v1349
        %v1386 = vunpack.c.h.b16 %v1349
        %v1387 = vpack.c.b16 %v1373, %v1371
        %v1388 = vpack.c.b16 %v1374, %v1372
        %v1389 = vpack.c.b16 %v1377, %v1375
        %v1390 = vpack.c.b16 %v1378, %v1376
        %v1391 = vpack.c.b16 %v1381, %v1379
        %v1392 = vpack.c.b16 %v1382, %v1380
        %v1393 = vpack.c.b16 %v1385, %v1383
        %v1394 = vpack.c.b16 %v1386, %v1384
        %v1404 = vsel %vm495, %v1340, 0
        %1406 = vmatprep.subr.bf16.mxu0 %v1388
        %1407 = vmatpush1.bf16.msra.mxu0 %v1387
        %1408 = vmatprep.subr.bf16.mxu0 %v1390
        %1409 = vmatpush1.bf16.msra.mxu0 %v1389
        %1410 = vmatprep.subr.bf16.mxu0 %v1392
        %1411 = vmatpush1.bf16.msra.mxu0 %v1391
        %1412 = vmatprep.subr.bf16.mxu0 %v1394
        %1413 = vmatpush1.bf16.msra.mxu0 %v1393
        %1414 = vmatprep.subr.bf16.mxu0 0
        %1415 = vmatpush1.bf16.msra.mxu0 0
        %1416 = vmatprep.subr.bf16.mxu0 0
        %1417 = vmatpush1.bf16.msra.mxu0 0
        %1418 = vmatprep.subr.bf16.mxu0 0
        %1419 = vmatpush1.bf16.msra.mxu0 0
        %1420 = vmatprep.subr.bf16.mxu0 0
        %1421 = vmatpush1.bf16.msra.mxu0 0
        %1422 = vmatprep.subr.bf16.mxu0 0
        %1423 = vmatpush1.bf16.msra.mxu0 0
        %1424 = vmatprep.subr.bf16.mxu0 0
        %1425 = vmatpush1.bf16.msra.mxu0 0
        %1426 = vmatprep.subr.bf16.mxu0 0
        %1427 = vmatpush1.bf16.msra.mxu0 0
        %1428 = vmatprep.subr.bf16.mxu0 0
        %1429 = vmatpush1.bf16.msra.mxu0 0
        %1430 = vmatprep.subr.bf16.mxu0 0
        %1431 = vmatpush1.bf16.msra.mxu0 0
        %1432 = vmatprep.subr.bf16.mxu0 0
        %1433 = vmatpush1.bf16.msra.mxu0 0
        %1434 = vmatprep.subr.bf16.mxu0 0
        %1435 = vmatpush1.bf16.msra.mxu0 0
        %1436 = vmatprep.subr.bf16.mxu0 0
        %1437 = vmatpush1.bf16.msra.mxu0 0
        %1438 = vmatprep.mubr.bf16.mxu0 0
        %1439 = vmatmul.mubr.bf16.gmra.mrb[0].mxu0 %v1404
        %v1440 = vpop.f32.mrb[0].mxu0
        %v1441 = vadd.f32 %v1356, %v1440
        %v1442 = vpop.f32.mrb[0].mxu0
        %v1443 = vadd.f32 %v1360, %v1442
        %v1444 = vpop.f32.mrb[0].mxu0
        %v1445 = vadd.f32 %v1356, %v1444
        %v1446 = vpop.f32.mrb[0].mxu0
        %v1447 = vadd.f32 %v1360, %v1446
        %1448 = vdwg.mxu0
        %v1449 = vmul.f32 %v1441, 0.17677669
        %v1450 = vmul.f32 %v1445, 0.17677669
        %1453 = vrot.lane.b32.xlu0 %v1449, 96
        %v1454 = vpop.permute.xlu0 %1453
        %1455 = vrot.lane.b32.xlu0 %v1450, 96
        %v1456 = vpop.permute.xlu0 %1455
        %v1459 = vpack.c.bf16 %v1450, %v1449
        %v1460 = vpack.c.bf16 %v1456, %v1454
        %1463 = vrot.lane.b32.xlu0 %v1441, 96
        %v1464 = vpop.permute.xlu0 %1463
        %1465 = vrot.lane.b32.xlu0 %v1445, 96
        %v1466 = vpop.permute.xlu0 %1465
        %v1469 = vpack.c.bf16 %v1445, %v1441
        %v1470 = vpack.c.bf16 %v1466, %v1464
        %1473 = vrot.lane.b32.xlu0 %v1443, 96
        %v1474 = vpop.permute.xlu0 %1473
        %1475 = vrot.lane.b32.xlu0 %v1447, 96
        %v1476 = vpop.permute.xlu0 %1475
        %v1479 = vpack.c.bf16 %v1447, %v1443
        %v1480 = vpack.c.bf16 %v1476, %v1474
        %1482 = vrot.lane.b32.xlu0 %v1469, 64
        %v1483 = vpop.permute.xlu0 %1482
        %v1485 = vsel %vm722, %v1459, 0
        %v1488 = vsel %vm722, %v1483, 0
        %1490 = vmatprep.subr.bf16.mxu0 0
        %1491 = vmatpush1.bf16.xpose.msra.mxu0 %v1488
        %1492 = vmatprep.subr.bf16.mxu0 0
        %1493 = vmatpush1.bf16.xpose.msra.mxu0 0
        %1494 = vmatprep.subr.bf16.mxu0 0
        %1495 = vmatpush1.bf16.xpose.msra.mxu0 0
        %1496 = vmatprep.subr.bf16.mxu0 0
        %1497 = vmatpush1.bf16.xpose.msra.mxu0 0
        %1498 = vmatprep.subr.bf16.mxu0 0
        %1499 = vmatpush1.bf16.xpose.msra.mxu0 0
        %1500 = vmatprep.subr.bf16.mxu0 0
        %1501 = vmatpush1.bf16.xpose.msra.mxu0 0
        %1502 = vmatprep.subr.bf16.mxu0 0
        %1503 = vmatpush1.bf16.xpose.msra.mxu0 0
        %1504 = vmatprep.subr.bf16.mxu0 0
        %1505 = vmatpush1.bf16.xpose.msra.mxu0 0
        %1506 = vmatprep.subr.bf16.mxu0 0
        %1507 = vmatpush1.bf16.xpose.msra.mxu0 0
        %1508 = vmatprep.subr.bf16.mxu0 0
        %1509 = vmatpush1.bf16.xpose.msra.mxu0 0
        %1510 = vmatprep.subr.bf16.mxu0 0
        %1511 = vmatpush1.bf16.xpose.msra.mxu0 0
        %1512 = vmatprep.subr.bf16.mxu0 0
        %1513 = vmatpush1.bf16.xpose.msra.mxu0 0
        %1514 = vmatprep.subr.bf16.mxu0 0
        %1515 = vmatpush1.bf16.xpose.msra.mxu0 0
        %1516 = vmatprep.subr.bf16.mxu0 0
        %1517 = vmatpush1.bf16.xpose.msra.mxu0 0
        %1518 = vmatprep.subr.bf16.mxu0 0
        %1519 = vmatpush1.bf16.xpose.msra.mxu0 0
        %1520 = vmatprep.subr.bf16.mxu0 0
        %1521 = vmatpush1.bf16.xpose.msra.mxu0 0
        %1522 = vmatprep.mubr.bf16.mxu0 0
        %1523 = vmatmul.mubr.bf16.gmra.mrb[0].mxu0 %v1485
        %v1524 = vpop.f32.mrb[0].mxu0
        %v1525 = vadd.f32 0.0, %v1524
        %v1526 = vpop.f32.mrb[0].mxu0
        %v1527 = vpop.f32.mrb[0].mxu0
        %v1528 = vadd.f32 0.0, %v1527
        %v1529 = vpop.f32.mrb[0].mxu0
        %1530 = vdwg.mxu0
        %1532 = vrot.lane.b32.xlu0 %v1470, 64
        %v1533 = vpop.permute.xlu0 %1532
        %v1535 = vsel %vm722, %v1460, 0
        %v1538 = vsel %vm722, %v1533, 0
        %1540 = vmatprep.subr.bf16.mxu0 0
        %1541 = vmatpush1.bf16.xpose.msra.mxu0 %v1538
        %1542 = vmatprep.subr.bf16.mxu0 0
        %1543 = vmatpush1.bf16.xpose.msra.mxu0 0
        %1544 = vmatprep.subr.bf16.mxu0 0
        %1545 = vmatpush1.bf16.xpose.msra.mxu0 0
        %1546 = vmatprep.subr.bf16.mxu0 0
        %1547 = vmatpush1.bf16.xpose.msra.mxu0 0
        %1548 = vmatprep.subr.bf16.mxu0 0
        %1549 = vmatpush1.bf16.xpose.msra.mxu0 0
        %1550 = vmatprep.subr.bf16.mxu0 0
        %1551 = vmatpush1.bf16.xpose.msra.mxu0 0
        %1552 = vmatprep.subr.bf16.mxu0 0
        %1553 = vmatpush1.bf16.xpose.msra.mxu0 0
        %1554 = vmatprep.subr.bf16.mxu0 0
        %1555 = vmatpush1.bf16.xpose.msra.mxu0 0
        %1556 = vmatprep.subr.bf16.mxu0 0
        %1557 = vmatpush1.bf16.xpose.msra.mxu0 0
        %1558 = vmatprep.subr.bf16.mxu0 0
        %1559 = vmatpush1.bf16.xpose.msra.mxu0 0
        %1560 = vmatprep.subr.bf16.mxu0 0
        %1561 = vmatpush1.bf16.xpose.msra.mxu0 0
        %1562 = vmatprep.subr.bf16.mxu0 0
        %1563 = vmatpush1.bf16.xpose.msra.mxu0 0
        %1564 = vmatprep.subr.bf16.mxu0 0
        %1565 = vmatpush1.bf16.xpose.msra.mxu0 0
        %1566 = vmatprep.subr.bf16.mxu0 0
        %1567 = vmatpush1.bf16.xpose.msra.mxu0 0
        %1568 = vmatprep.subr.bf16.mxu0 0
        %1569 = vmatpush1.bf16.xpose.msra.mxu0 0
        %1570 = vmatprep.subr.bf16.mxu0 0
        %1571 = vmatpush1.bf16.xpose.msra.mxu0 0
        %1572 = vmatprep.mubr.bf16.mxu0 0
        %1573 = vmatmul.mubr.bf16.gmra.mrb[0].mxu0 %v1535
        %v1574 = vpop.f32.mrb[0].mxu0
        %v1575 = vadd.f32 0.0, %v1574
        %v1576 = vpop.f32.mrb[0].mxu0
        %v1577 = vpop.f32.mrb[0].mxu0
        %v1578 = vadd.f32 0.0, %v1577
        %v1579 = vpop.f32.mrb[0].mxu0
        %1580 = vdwg.mxu0
        %v1581 = vsel %vm820, %v1525, -inf
        %1582 = vmax.xlane.f32.xlu0 %v1581
        %v1583 = vpop.xlane.xlu0 %1582
        %v1584 = vsel %vm820, %v1528, -inf
        %1585 = vmax.xlane.f32.xlu0 %v1584
        %v1586 = vpop.xlane.xlu0 %1585
        %v1587 = vsel %vm820, %v1575, -inf
        %1588 = vmax.xlane.f32.xlu0 %v1587
        %v1589 = vpop.xlane.xlu0 %1588
        %v1590 = vsel %vm820, %v1578, -inf
        %1591 = vmax.xlane.f32.xlu0 %v1590
        %v1592 = vpop.xlane.xlu0 %1591
        %v1593 = vsub.f32 %v1525, %v1583
        %v1594 = vsub.f32 %v1528, %v1586
        %v1595 = vsub.f32 %v1575, %v1589
        %v1596 = vsub.f32 %v1578, %v1592
        %v1597 = vmul.f32 %v1593, 1.442695
        %v1598 = vpow.pop %v1597
        %v1599 = vmul.f32 %v1594, 1.442695
        %v1600 = vpow.pop %v1599
        %v1601 = vmul.f32 %v1595, 1.442695
        %v1602 = vpow.pop %v1601
        %v1603 = vmul.f32 %v1596, 1.442695
        %v1604 = vpow.pop %v1603
        %v1605 = vsel %vm820, %v1598, 0.0
        %1606 = vadd.xlane.f32.xlu0 %v1605
        %v1607 = vpop.xlane.xlu0 %1606
        %v1608 = vsel %vm820, %v1600, 0.0
        %1609 = vadd.xlane.f32.xlu0 %v1608
        %v1610 = vpop.xlane.xlu0 %1609
        %v1611 = vsel %vm820, %v1602, 0.0
        %1612 = vadd.xlane.f32.xlu0 %v1611
        %v1613 = vpop.xlane.xlu0 %1612
        %v1614 = vsel %vm820, %v1604, 0.0
        %1615 = vadd.xlane.f32.xlu0 %v1614
        %v1616 = vpop.xlane.xlu0 %1615
        %v1617 = vrcp.pop %v1607
        %v1618 = vmul.f32 %v1598, %v1617
        %v1619 = vrcp.pop %v1610
        %v1620 = vmul.f32 %v1600, %v1619
        %v1621 = vrcp.pop %v1613
        %v1622 = vmul.f32 %v1602, %v1621
        %v1623 = vrcp.pop %v1616
        %v1624 = vmul.f32 %v1604, %v1623
        %v1625 = vpack.c.bf16 %v1620, %v1618
        %v1626 = vpack.c.bf16 %v1624, %v1622
        %v1628 = vsel %vm820, %v1625, 0
        %1630 = vmatprep.subr.bf16.mxu0 0
        %1631 = vmatpush1.bf16.msra.mxu0 %v1479
        %1632 = vmatprep.subr.bf16.mxu0 0
        %1633 = vmatpush1.bf16.msra.mxu0 0
        %1634 = vmatprep.subr.bf16.mxu0 0
        %1635 = vmatpush1.bf16.msra.mxu0 0
        %1636 = vmatprep.subr.bf16.mxu0 0
        %1637 = vmatpush1.bf16.msra.mxu0 0
        %1638 = vmatprep.subr.bf16.mxu0 0
        %1639 = vmatpush1.bf16.msra.mxu0 0
        %1640 = vmatprep.subr.bf16.mxu0 0
        %1641 = vmatpush1.bf16.msra.mxu0 0
        %1642 = vmatprep.subr.bf16.mxu0 0
        %1643 = vmatpush1.bf16.msra.mxu0 0
        %1644 = vmatprep.subr.bf16.mxu0 0
        %1645 = vmatpush1.bf16.msra.mxu0 0
        %1646 = vmatprep.subr.bf16.mxu0 0
        %1647 = vmatpush1.bf16.msra.mxu0 0
        %1648 = vmatprep.subr.bf16.mxu0 0
        %1649 = vmatpush1.bf16.msra.mxu0 0
        %1650 = vmatprep.subr.bf16.mxu0 0
        %1651 = vmatpush1.bf16.msra.mxu0 0
        %1652 = vmatprep.subr.bf16.mxu0 0
        %1653 = vmatpush1.bf16.msra.mxu0 0
        %1654 = vmatprep.subr.bf16.mxu0 0
        %1655 = vmatpush1.bf16.msra.mxu0 0
        %1656 = vmatprep.subr.bf16.mxu0 0
        %1657 = vmatpush1.bf16.msra.mxu0 0
        %1658 = vmatprep.subr.bf16.mxu0 0
        %1659 = vmatpush1.bf16.msra.mxu0 0
        %1660 = vmatprep.subr.bf16.mxu0 0
        %1661 = vmatpush1.bf16.msra.mxu0 0
        %1662 = vmatprep.mubr.bf16.mxu0 0
        %1663 = vmatmul.mubr.bf16.gmra.mrb[0].mxu0 %v1628
        %v1664 = vpop.f32.mrb[0].mxu0
        %v1665 = vadd.f32 0.0, %v1664
        %v1666 = vpop.f32.mrb[0].mxu0
        %v1667 = vpop.f32.mrb[0].mxu0
        %v1668 = vadd.f32 0.0, %v1667
        %v1669 = vpop.f32.mrb[0].mxu0
        %1670 = vdwg.mxu0
        %v1672 = vsel %vm820, %v1626, 0
        %1674 = vmatprep.subr.bf16.mxu0 0
        %1675 = vmatpush1.bf16.msra.mxu0 %v1480
        %1676 = vmatprep.subr.bf16.mxu0 0
        %1677 = vmatpush1.bf16.msra.mxu0 0
        %1678 = vmatprep.subr.bf16.mxu0 0
        %1679 = vmatpush1.bf16.msra.mxu0 0
        %1680 = vmatprep.subr.bf16.mxu0 0
        %1681 = vmatpush1.bf16.msra.mxu0 0
        %1682 = vmatprep.subr.bf16.mxu0 0
        %1683 = vmatpush1.bf16.msra.mxu0 0
        %1684 = vmatprep.subr.bf16.mxu0 0
        %1685 = vmatpush1.bf16.msra.mxu0 0
        %1686 = vmatprep.subr.bf16.mxu0 0
        %1687 = vmatpush1.bf16.msra.mxu0 0
        %1688 = vmatprep.subr.bf16.mxu0 0
        %1689 = vmatpush1.bf16.msra.mxu0 0
        %1690 = vmatprep.subr.bf16.mxu0 0
        %1691 = vmatpush1.bf16.msra.mxu0 0
        %1692 = vmatprep.subr.bf16.mxu0 0
        %1693 = vmatpush1.bf16.msra.mxu0 0
        %1694 = vmatprep.subr.bf16.mxu0 0
        %1695 = vmatpush1.bf16.msra.mxu0 0
        %1696 = vmatprep.subr.bf16.mxu0 0
        %1697 = vmatpush1.bf16.msra.mxu0 0
        %1698 = vmatprep.subr.bf16.mxu0 0
        %1699 = vmatpush1.bf16.msra.mxu0 0
        %1700 = vmatprep.subr.bf16.mxu0 0
        %1701 = vmatpush1.bf16.msra.mxu0 0
        %1702 = vmatprep.subr.bf16.mxu0 0
        %1703 = vmatpush1.bf16.msra.mxu0 0
        %1704 = vmatprep.subr.bf16.mxu0 0
        %1705 = vmatpush1.bf16.msra.mxu0 0
        %1706 = vmatprep.mubr.bf16.mxu0 0
        %1707 = vmatmul.mubr.bf16.gmra.mrb[0].mxu0 %v1672
        %v1708 = vpop.f32.mrb[0].mxu0
        %v1709 = vadd.f32 0.0, %v1708
        %v1710 = vpop.f32.mrb[0].mxu0
        %v1711 = vpop.f32.mrb[0].mxu0
        %v1712 = vadd.f32 0.0, %v1711
        %v1713 = vpop.f32.mrb[0].mxu0
        %1714 = vdwg.mxu0
        %1717 = vrot.lane.b32.xlu0 %v1709, 32
        %v1718 = vpop.permute.xlu0 %1717
        %1719 = vrot.lane.b32.xlu0 %v1712, 32
        %v1720 = vpop.permute.xlu0 %1719
        %v1723 = vsel %vm722, %v1665, %v1718
        %v1724 = vsel %vm722, %v1668, %v1720
        %v1725 = vpack.c.bf16 %v1724, %v1723
        %s1726 = scalar_lea.vmem %s5, 32
        %v1727 = vld [vmem:[%s1726] sm:$0xf]
        %v1728 = vld [vmem:[%s1726 + $0x4] sm:$0xf]
        %v1729 = vld [vmem:[%s1726 + $0x8] sm:$0xf]
        %v1730 = vld [vmem:[%s1726 + $0xc] sm:$0xf]
        %v1731 = vld [vmem:[%s1726 + $0x10] sm:$0xf]
        %v1732 = vld [vmem:[%s1726 + $0x14] sm:$0xf]
        %v1733 = vld [vmem:[%s1726 + $0x18] sm:$0xf]
        %v1734 = vld [vmem:[%s1726 + $0x1c] sm:$0xf]
        %v1735 = vlaneseq
        %v1736 = vshrl.u32 %v1735, 7
        %v1737 = vsub.s32 4, %v1736
        %v1738 = vrot.slane %v1301, %v1737
        %v1747 = vunpack.c.l.b16 %v1727
        %v1748 = vunpack.c.l.b16 %v1728
        %v1749 = vunpack.c.l.b16 %v1729
        %v1750 = vunpack.c.l.b16 %v1730
        %v1751 = vunpack.c.l.b16 %v1731
        %v1752 = vunpack.c.l.b16 %v1732
        %v1753 = vunpack.c.l.b16 %v1733
        %v1754 = vunpack.c.l.b16 %v1734
        %v1755 = vpack.c.b16 %v1748, %v1747
        %v1756 = vpack.c.b16 %v1750, %v1749
        %v1757 = vpack.c.b16 %v1752, %v1751
        %v1758 = vpack.c.b16 %v1754, %v1753
        %v1764 = vsel %vm495, %v1725, 0
        %1766 = vmatprep.subr.bf16.mxu0 0
        %1767 = vmatpush1.bf16.msra.mxu0 %v1755
        %1768 = vmatprep.subr.bf16.mxu0 0
        %1769 = vmatpush1.bf16.msra.mxu0 %v1756
        %1770 = vmatprep.subr.bf16.mxu0 0
        %1771 = vmatpush1.bf16.msra.mxu0 %v1757
        %1772 = vmatprep.subr.bf16.mxu0 0
        %1773 = vmatpush1.bf16.msra.mxu0 %v1758
        %1774 = vmatprep.subr.bf16.mxu0 0
        %1775 = vmatpush1.bf16.msra.mxu0 0
        %1776 = vmatprep.subr.bf16.mxu0 0
        %1777 = vmatpush1.bf16.msra.mxu0 0
        %1778 = vmatprep.subr.bf16.mxu0 0
        %1779 = vmatpush1.bf16.msra.mxu0 0
        %1780 = vmatprep.subr.bf16.mxu0 0
        %1781 = vmatpush1.bf16.msra.mxu0 0
        %1782 = vmatprep.subr.bf16.mxu0 0
        %1783 = vmatpush1.bf16.msra.mxu0 0
        %1784 = vmatprep.subr.bf16.mxu0 0
        %1785 = vmatpush1.bf16.msra.mxu0 0
        %1786 = vmatprep.subr.bf16.mxu0 0
        %1787 = vmatpush1.bf16.msra.mxu0 0
        %1788 = vmatprep.subr.bf16.mxu0 0
        %1789 = vmatpush1.bf16.msra.mxu0 0
        %1790 = vmatprep.subr.bf16.mxu0 0
        %1791 = vmatpush1.bf16.msra.mxu0 0
        %1792 = vmatprep.subr.bf16.mxu0 0
        %1793 = vmatpush1.bf16.msra.mxu0 0
        %1794 = vmatprep.subr.bf16.mxu0 0
        %1795 = vmatpush1.bf16.msra.mxu0 0
        %1796 = vmatprep.subr.bf16.mxu0 0
        %1797 = vmatpush1.bf16.msra.mxu0 0
        %1798 = vmatprep.mubr.bf16.mxu0 0
        %1799 = vmatmul.mubr.bf16.gmra.mrb[0].mxu0 %v1764
        %v1800 = vpop.f32.mrb[0].mxu0
        %v1801 = vadd.f32 %v1738, %v1800
        %v1802 = vpop.f32.mrb[0].mxu0
        %v1803 = vpop.f32.mrb[0].mxu0
        %v1804 = vadd.f32 %v1738, %v1803
        %v1805 = vpop.f32.mrb[0].mxu0
        %1806 = vdwg.mxu0
        %v1807 = vadd.f32 %v1298, %v1801
        %v1808 = vadd.f32 %v1299, %v1804
        %v1809 = vsel %vm495, %v1807, 0.0
        %1810 = vadd.xlane.f32.xlu0 %v1809
        %v1811 = vpop.xlane.xlu0 %1810
        %v1812 = vsel %vm495, %v1808, 0.0
        %1813 = vadd.xlane.f32.xlu0 %v1812
        %v1814 = vpop.xlane.xlu0 %1813
        %v1815 = vmul.f32 %v1811, %v547
        %v1816 = vmul.f32 %v1814, %v547
        %v1817 = vsub.f32 %v1807, %v1815
        %v1818 = vsub.f32 %v1808, %v1816
        %v1819 = vmul.f32 %v1817, %v1817
        %v1820 = vmul.f32 %v1818, %v1818
        %v1821 = vsel %vm495, %v1819, 0.0
        %1822 = vadd.xlane.f32.xlu0 %v1821
        %v1823 = vpop.xlane.xlu0 %1822
        %v1824 = vsel %vm495, %v1820, 0.0
        %1825 = vadd.xlane.f32.xlu0 %v1824
        %v1826 = vpop.xlane.xlu0 %1825
        %v1827 = vmul.f32 %v1823, %v547
        %v1828 = vmul.f32 %v1826, %v547
        %v1829 = vadd.f32 %v1827, 1e-06
        %v1830 = vadd.f32 %v1828, 1e-06
        %v1831 = vrsqrt.pop %v1829
        %v1832 = vrsqrt.pop %v1830
        %v1833 = vmul.f32 %v1817, %v1831
        %v1834 = vmul.f32 %v1818, %v1832
        %v1835 = vlaneseq
        %v1836 = vshrl.u32 %v1835, 7
        %v1837 = vsub.s32 2, %v1836
        %v1838 = vrot.slane %v1301, %v1837
        %v1839 = vmul.f32 %v1833, %v1838
        %v1840 = vmul.f32 %v1834, %v1838
        %v1841 = vlaneseq
        %v1842 = vshrl.u32 %v1841, 7
        %v1843 = vsub.s32 3, %v1842
        %v1844 = vrot.slane %v1301, %v1843
        %v1845 = vadd.f32 %v1839, %v1844
        %v1846 = vadd.f32 %v1840, %v1844
        %v1847 = vpack.c.bf16 %v1846, %v1845
        %s1848 = scalar_lea.vmem %s6, 32
        %v1849 = vld [vmem:[%s1848] sm:$0xf]
        %v1850 = vld [vmem:[%s1848 + $0x4] sm:$0xf]
        %v1851 = vld [vmem:[%s1848 + $0x8] sm:$0xf]
        %v1852 = vld [vmem:[%s1848 + $0xc] sm:$0xf]
        %v1853 = vld [vmem:[%s1848 + $0x10] sm:$0xf]
        %v1854 = vld [vmem:[%s1848 + $0x14] sm:$0xf]
        %v1855 = vld [vmem:[%s1848 + $0x18] sm:$0xf]
        %v1856 = vld [vmem:[%s1848 + $0x1c] sm:$0xf]
        %s1857 = scalar_lea.vmem %s9, 1
        %v1858 = vld [vmem:[%s1857] sm:$0x1]
        %v1860 = vlaneseq
        %v1861 = vshrl.u32 %v1860, 7
        %v1862 = vsub.s32 0, %v1861
        %v1863 = vrot.slane %v1858, %v1862
        %v1873 = vunpack.c.l.b16 %v1849
        %v1874 = vunpack.c.l.b16 %v1850
        %v1875 = vunpack.c.l.b16 %v1851
        %v1876 = vunpack.c.l.b16 %v1852
        %v1877 = vunpack.c.l.b16 %v1853
        %v1878 = vunpack.c.l.b16 %v1854
        %v1879 = vunpack.c.l.b16 %v1855
        %v1880 = vunpack.c.l.b16 %v1856
        %v1881 = vpack.c.b16 %v1874, %v1873
        %v1882 = vpack.c.b16 %v1876, %v1875
        %v1883 = vpack.c.b16 %v1878, %v1877
        %v1884 = vpack.c.b16 %v1880, %v1879
        %v1890 = vsel %vm495, %v1847, 0
        %1892 = vmatprep.subr.bf16.mxu0 0
        %1893 = vmatpush1.bf16.msra.mxu0 %v1881
        %1894 = vmatprep.subr.bf16.mxu0 0
        %1895 = vmatpush1.bf16.msra.mxu0 %v1882
        %1896 = vmatprep.subr.bf16.mxu0 0
        %1897 = vmatpush1.bf16.msra.mxu0 %v1883
        %1898 = vmatprep.subr.bf16.mxu0 0
        %1899 = vmatpush1.bf16.msra.mxu0 %v1884
        %1900 = vmatprep.subr.bf16.mxu0 0
        %1901 = vmatpush1.bf16.msra.mxu0 0
        %1902 = vmatprep.subr.bf16.mxu0 0
        %1903 = vmatpush1.bf16.msra.mxu0 0
        %1904 = vmatprep.subr.bf16.mxu0 0
        %1905 = vmatpush1.bf16.msra.mxu0 0
        %1906 = vmatprep.subr.bf16.mxu0 0
        %1907 = vmatpush1.bf16.msra.mxu0 0
        %1908 = vmatprep.subr.bf16.mxu0 0
        %1909 = vmatpush1.bf16.msra.mxu0 0
        %1910 = vmatprep.subr.bf16.mxu0 0
        %1911 = vmatpush1.bf16.msra.mxu0 0
        %1912 = vmatprep.subr.bf16.mxu0 0
        %1913 = vmatpush1.bf16.msra.mxu0 0
        %1914 = vmatprep.subr.bf16.mxu0 0
        %1915 = vmatpush1.bf16.msra.mxu0 0
        %1916 = vmatprep.subr.bf16.mxu0 0
        %1917 = vmatpush1.bf16.msra.mxu0 0
        %1918 = vmatprep.subr.bf16.mxu0 0
        %1919 = vmatpush1.bf16.msra.mxu0 0
        %1920 = vmatprep.subr.bf16.mxu0 0
        %1921 = vmatpush1.bf16.msra.mxu0 0
        %1922 = vmatprep.subr.bf16.mxu0 0
        %1923 = vmatpush1.bf16.msra.mxu0 0
        %1924 = vmatprep.mubr.bf16.mxu0 0
        %1925 = vmatmul.mubr.bf16.gmra.mrb[0].mxu0 %v1890
        %v1926 = vpop.f32.mrb[0].mxu0
        %v1927 = vadd.f32 %v1863, %v1926
        %v1928 = vpop.f32.mrb[0].mxu0
        %v1929 = vpop.f32.mrb[0].mxu0
        %v1930 = vadd.f32 %v1863, %v1929
        %v1931 = vpop.f32.mrb[0].mxu0
        %1932 = vdwg.mxu0
        %v1933 = vmul.f32 %v1927, 0.5
        %v1934 = vmul.f32 %v1930, 0.5
        %v1935 = vmul.f32 %v1927, 0.044715
        %v1936 = vmul.f32 %v1930, 0.044715
        %v1937 = vmul.f32 %v1935, %v1927
        %v1938 = vmul.f32 %v1936, %v1930
        %v1939 = vmul.f32 %v1937, %v1927
        %v1940 = vmul.f32 %v1938, %v1930
        %v1941 = vadd.f32 %v1927, %v1939
        %v1942 = vadd.f32 %v1930, %v1940
        %v1943 = vmul.f32 %v1941, 0.7978846
        %v1944 = vmul.f32 %v1942, 0.7978846
        %v1945 = vtanh.pop %v1943
        %v1946 = vtanh.pop %v1944
        %v1947 = vadd.f32 %v1945, 1.0
        %v1948 = vadd.f32 %v1946, 1.0
        %v1949 = vmul.f32 %v1933, %v1947
        %v1950 = vmul.f32 %v1934, %v1948
        %v1951 = vpack.c.bf16 %v1950, %v1949
        %s1952 = scalar_lea.vmem %s7, 64
        %v1953 = vld [vmem:[%s1952] sm:$0xf]
        %v1954 = vld [vmem:[%s1952 + $0x4] sm:$0xf]
        %v1955 = vld [vmem:[%s1952 + $0x8] sm:$0xf]
        %v1956 = vld [vmem:[%s1952 + $0xc] sm:$0xf]
        %v1957 = vld [vmem:[%s1952 + $0x10] sm:$0xf]
        %v1958 = vld [vmem:[%s1952 + $0x14] sm:$0xf]
        %v1959 = vld [vmem:[%s1952 + $0x18] sm:$0xf]
        %v1960 = vld [vmem:[%s1952 + $0x1c] sm:$0xf]
        %v1961 = vld [vmem:[%s1952 + $0x20] sm:$0xf]
        %v1962 = vld [vmem:[%s1952 + $0x24] sm:$0xf]
        %v1963 = vld [vmem:[%s1952 + $0x28] sm:$0xf]
        %v1964 = vld [vmem:[%s1952 + $0x2c] sm:$0xf]
        %v1965 = vld [vmem:[%s1952 + $0x30] sm:$0xf]
        %v1966 = vld [vmem:[%s1952 + $0x34] sm:$0xf]
        %v1967 = vld [vmem:[%s1952 + $0x38] sm:$0xf]
        %v1968 = vld [vmem:[%s1952 + $0x3c] sm:$0xf]
        %v1969 = vlaneseq
        %v1970 = vshrl.u32 %v1969, 7
        %v1971 = vsub.s32 5, %v1970
        %v1972 = vrot.slane %v1301, %v1971
        %v1989 = vunpack.c.l.b16 %v1953
        %v1990 = vunpack.c.l.b16 %v1954
        %v1991 = vunpack.c.l.b16 %v1955
        %v1992 = vunpack.c.l.b16 %v1956
        %v1993 = vunpack.c.l.b16 %v1957
        %v1994 = vunpack.c.l.b16 %v1958
        %v1995 = vunpack.c.l.b16 %v1959
        %v1996 = vunpack.c.l.b16 %v1960
        %v1997 = vunpack.c.l.b16 %v1961
        %v1998 = vunpack.c.l.b16 %v1962
        %v1999 = vunpack.c.l.b16 %v1963
        %v2000 = vunpack.c.l.b16 %v1964
        %v2001 = vunpack.c.l.b16 %v1965
        %v2002 = vunpack.c.l.b16 %v1966
        %v2003 = vunpack.c.l.b16 %v1967
        %v2004 = vunpack.c.l.b16 %v1968
        %v2005 = vpack.c.b16 %v1990, %v1989
        %v2006 = vpack.c.b16 %v1992, %v1991
        %v2007 = vpack.c.b16 %v1994, %v1993
        %v2008 = vpack.c.b16 %v1996, %v1995
        %v2009 = vpack.c.b16 %v1998, %v1997
        %v2010 = vpack.c.b16 %v2000, %v1999
        %v2011 = vpack.c.b16 %v2002, %v2001
        %v2012 = vpack.c.b16 %v2004, %v2003
        %2021 = vmatprep.subr.bf16.mxu0 0
        %2022 = vmatpush1.bf16.msra.mxu0 %v2005
        %2023 = vmatprep.subr.bf16.mxu0 0
        %2024 = vmatpush1.bf16.msra.mxu0 %v2006
        %2025 = vmatprep.subr.bf16.mxu0 0
        %2026 = vmatpush1.bf16.msra.mxu0 %v2007
        %2027 = vmatprep.subr.bf16.mxu0 0
        %2028 = vmatpush1.bf16.msra.mxu0 %v2008
        %2029 = vmatprep.subr.bf16.mxu0 0
        %2030 = vmatpush1.bf16.msra.mxu0 %v2009
        %2031 = vmatprep.subr.bf16.mxu0 0
        %2032 = vmatpush1.bf16.msra.mxu0 %v2010
        %2033 = vmatprep.subr.bf16.mxu0 0
        %2034 = vmatpush1.bf16.msra.mxu0 %v2011
        %2035 = vmatprep.subr.bf16.mxu0 0
        %2036 = vmatpush1.bf16.msra.mxu0 %v2012
        %2037 = vmatprep.subr.bf16.mxu0 0
        %2038 = vmatpush1.bf16.msra.mxu0 0
        %2039 = vmatprep.subr.bf16.mxu0 0
        %2040 = vmatpush1.bf16.msra.mxu0 0
        %2041 = vmatprep.subr.bf16.mxu0 0
        %2042 = vmatpush1.bf16.msra.mxu0 0
        %2043 = vmatprep.subr.bf16.mxu0 0
        %2044 = vmatpush1.bf16.msra.mxu0 0
        %2045 = vmatprep.subr.bf16.mxu0 0
        %2046 = vmatpush1.bf16.msra.mxu0 0
        %2047 = vmatprep.subr.bf16.mxu0 0
        %2048 = vmatpush1.bf16.msra.mxu0 0
        %2049 = vmatprep.subr.bf16.mxu0 0
        %2050 = vmatpush1.bf16.msra.mxu0 0
        %2051 = vmatprep.subr.bf16.mxu0 0
        %2052 = vmatpush1.bf16.msra.mxu0 0
        %2053 = vmatprep.mubr.bf16.mxu0 0
        %2054 = vmatmul.mubr.bf16.gmra.mrb[0].mxu0 %v1951
        %v2055 = vpop.f32.mrb[0].mxu0
        %v2056 = vadd.f32 %v1972, %v2055
        %v2057 = vpop.f32.mrb[0].mxu0
        %v2058 = vpop.f32.mrb[0].mxu0
        %v2059 = vadd.f32 %v1972, %v2058
        %v2060 = vpop.f32.mrb[0].mxu0
        %2061 = vdwg.mxu0
        %v2062 = vadd.f32 %v1807, %v2056
        %v2063 = vadd.f32 %v1808, %v2059
        %v2064 = vld [vmem:[%s10] sm:$0x3]
        %v2065 = vsel %vm495, %v2062, 0.0
        %2066 = vadd.xlane.f32.xlu0 %v2065
        %v2067 = vpop.xlane.xlu0 %2066
        %v2068 = vsel %vm495, %v2063, 0.0
        %2069 = vadd.xlane.f32.xlu0 %v2068
        %v2070 = vpop.xlane.xlu0 %2069
        %v2071 = vmul.f32 %v2067, %v547
        %v2072 = vmul.f32 %v2070, %v547
        %v2073 = vsub.f32 %v2062, %v2071
        %v2074 = vsub.f32 %v2063, %v2072
        %v2075 = vmul.f32 %v2073, %v2073
        %v2076 = vmul.f32 %v2074, %v2074
        %v2077 = vsel %vm495, %v2075, 0.0
        %2078 = vadd.xlane.f32.xlu0 %v2077
        %v2079 = vpop.xlane.xlu0 %2078
        %v2080 = vsel %vm495, %v2076, 0.0
        %2081 = vadd.xlane.f32.xlu0 %v2080
        %v2082 = vpop.xlane.xlu0 %2081
        %v2083 = vmul.f32 %v2079, %v547
        %v2084 = vmul.f32 %v2082, %v547
        %v2085 = vadd.f32 %v2083, 1e-06
        %v2086 = vadd.f32 %v2084, 1e-06
        %v2087 = vrsqrt.pop %v2085
        %v2088 = vrsqrt.pop %v2086
        %v2089 = vmul.f32 %v2073, %v2087
        %v2090 = vmul.f32 %v2074, %v2088
        %v2091 = vlaneseq
        %v2092 = vshrl.u32 %v2091, 7
        %v2093 = vsub.s32 0, %v2092
        %v2094 = vrot.slane %v2064, %v2093
        %v2095 = vmul.f32 %v2089, %v2094
        %v2096 = vmul.f32 %v2090, %v2094
        %v2097 = vlaneseq
        %v2098 = vshrl.u32 %v2097, 7
        %v2099 = vsub.s32 1, %v2098
        %v2100 = vrot.slane %v2064, %v2099
        %v2101 = vadd.f32 %v2095, %v2100
        %v2102 = vadd.f32 %v2096, %v2100
        %2103 = vst.msk [vmem:[%s379] sm:$0xff] %vm495, %v2101
        %2104 = vst.msk [vmem:[%s379 + $0x8] sm:$0xff] %vm495, %v2102
        %s2105 = sand.u32 %s269, 1
        %s2106 = scalar_lea.sflag [#allocation3], %s2105
        %s2107 = sand.u32 %s269, 1
        %s2108 = smul.addr %s2107, 16
        %s2109 = scalar_lea.vmem [#allocation2], %s2108
        // Predicated region
        $region65: #{tpu_custom_call.1} parent=63 // pred_check
          %p2110 = pneg %p279
        $region66: #{tpu_custom_call.1} parent=63 // pred_check_branch
          %2112 = sbr.rel (%p2110) target = $region68
        $region67: #{tpu_custom_call.1} parent=63 // pred_region
          %s2114 = ssub.s32 256, 256
          %2115 = vsyncadd %s2106, %s2114
          %s2116 = smul.addr %s25, 2
          %s2117 = smul.addr %s2116, 128
          %s2118 = scalar_lea.hbm %s11, %s2117
          %s2119 = sshll.u32 %s2109, 4
          %s2120 = int_to_ptr.vmem [resolvable:$true] %s2119
          %2125 = dma.vmem_to_hbm [thread:$0]  %s2120, 256, %s2118, %s2106, 128, 128, 8
        $region68: #{tpu_custom_call.1} parent=63 // pred_fallthru
          _
      $region64: #{tpu_custom_call.1} parent=5 // pred_fallthru
        _
      %p2126 = scmp.le.s32.totalorder 2, %s20
      // Predicated region
      $region69: #{tpu_custom_call.1} parent=5 // pred_check
        %p2127 = pneg %p2126
      $region70: #{tpu_custom_call.1} parent=5 // pred_check_branch
        %2129 = sbr.rel (%p2127) target = $region72
      $region71: #{tpu_custom_call.1} parent=5 // pred_region
        %s2130 = ssub.s32 %s20, 2
        // Predicated region
        $region73: #{tpu_custom_call.1} parent=71 // pred_check
          %p2131 = pneg %p285
        $region74: #{tpu_custom_call.1} parent=71 // pred_check_branch
          %2133 = sbr.rel (%p2131) target = $region76
        $region75: #{tpu_custom_call.1} parent=71 // pred_region
          %s2134 = sand.u32 %s270, 1
          %s2135 = scalar_lea.sflag [#allocation3], %s2134
          %s2136 = sand.u32 %s270, 1
          %s2137 = smul.addr %s2136, 16
          %s2138 = scalar_lea.vmem [#allocation2], %s2137
          %2139 = dma.done %s2135, 256
        $region76: #{tpu_custom_call.1} parent=71 // pred_fallthru
          _
      $region72: #{tpu_custom_call.1} parent=5 // pred_fallthru
        _
    $region6: #{tpu_custom_call.1} parent=1 // loop_footer
      %s24 = sadd.s32 1, %s20
    $region7: #{tpu_custom_call.1} parent=1 // loop_footer_branch
      %19 = sbr.rel target = $region3
    $region8: #{tpu_custom_call.1} parent=1 // loop_exit
      _
    %2140 = vsyncpa [#allocation3], 1
    %s2141 = scalar_lea.sflag [#allocation3], 1
    %2142 = vsyncpa %s2141, 1

</llo_original>
